<compile_context>
chip_gen: v7x
topology: tpu7x:2x2x1
jax: 0.10.0
libtpu: 0.0.40
codegen_flags: <defaults>
</compile_context>

<pallas_src>
import jax
import jax.numpy as jnp
import numpy as np
from jax.experimental import pallas as pl
from jax.experimental.pallas import tpu as pltpu

_EXACT = jax.lax.Precision.HIGHEST    # reference only
_SUB = 8                              # sublane quantum: channel dims padded to this


def _round_up(c):
    return -(-c // _SUB) * _SUB


def _interp_matrix_align_corners(dst, src):
    """(dst, src) 1-D bilinear interpolation matrix, align_corners=True (numpy)."""
    m = np.zeros((dst, src), np.float32)
    if dst == 1:
        pos = np.zeros((1,), np.float64)
    else:
        pos = np.arange(dst, dtype=np.float64) * (src - 1) / (dst - 1)
    lo = np.clip(np.floor(pos).astype(np.int64), 0, src - 1)
    hi = np.minimum(lo + 1, src - 1)
    frac = (pos - lo).astype(np.float32)
    m[np.arange(dst), lo] += 1.0 - frac
    m[np.arange(dst), hi] += frac
    return m


def _tap_masks(Hs, Ws):
    """(9, 1, Hs*Ws) f32 validity masks for the 9 taps of a 'same' 3x3 conv."""
    P = Hs * Ws
    row = np.arange(P) // Ws
    col = np.arange(P) % Ws
    m = np.zeros((9, 1, P), np.float32)
    for ky in range(3):
        for kx in range(3):
            dy, dx = ky - 1, kx - 1
            valid = ((row + dy >= 0) & (row + dy < Hs) &
                     (col + dx >= 0) & (col + dx < Ws))
            m[ky * 3 + kx, 0, :] = valid.astype(np.float32)
    return m


def _pick_batch_block(n):
    """Batch elements per grid step: amortize per-step overhead but keep >=2
    grid steps when n >= 2 so both v7x TensorCores stay busy."""
    if n <= 2:
        return 1
    for nb in range(min(n // 2, 8), 0, -1):
        if n % nb == 0:
            return nb
    return 1


# ----------------------------------------------------------------------------
# Single fused kernel: skip DoubleResConv -> bilinear upsample -> (implicit
# concat) reduce conv + GELU -> fusion DoubleResConv. Nb batch elems per step.
# All channel counts passed here are already padded to sublane multiples.
# ----------------------------------------------------------------------------
def _make_fused_kernel(Hs, Ws, Cc, Cs, Cd, nb):
    Ps = Hs * Ws
    Ccat = Cc + Cs
    # static row offsets into the packed weight / bias operands
    OW_S1, OW_S2, OW_RED = 0, Cs, 2 * Cs
    OW_F1, OW_F2 = 2 * Cs + Cd, 2 * Cs + 2 * Cd
    OB_S1, OB_S2, OB_F1, OB_F2 = 0, Cs, 2 * Cs, 2 * Cs + Cd

    def gelu(x):
        # tanh-approx GELU: the tanh runs on the EUP slot, ~6 VPU ops total
        # (perf fix: the erf polynomial was the largest VPU consumer).
        return 0.5 * x * (1.0 + jnp.tanh(0.7978845608028654 *
                                         (x + 0.044715 * (x * x * x))))

    def kernel(cur_ref, skip_ref, m2t_ref, mask_ref, w_ref, b_ref, out_ref):
        f32 = jnp.float32

        def conv3x3(x, cin, w_row, cout):
            # 'same' 3x3 conv on the lane-flattened (cin, Ps) activation as a
            # SINGLE K = 9*cin MXU matmul: the 9 taps are lane rotations (XLU)
            # + precomputed edge masks, sublane-stacked into one operand.
            # DEFAULT precision = one bf16 MXU pass, f32 accumulate.
            taps = []
            for ky in range(3):
                for kx in range(3):
                    s = (ky - 1) * Ws + (kx - 1)
                    if s == 0:
                        taps.append(x)
                    else:
                        rolled = pltpu.roll(x, shift=(-s) % Ps, axis=1)
                        taps.append(rolled * mask_ref[ky * 3 + kx, 0:cin, :])
            stacked = jnp.concatenate(taps, axis=0)            # (9*cin, Ps)
            w = w_ref[w_row:w_row + cout, 0:9 * cin]           # (cout, 9*cin)
            return jnp.dot(w, stacked, preferred_element_type=f32)

        def bias(off, cout):
            return b_ref[off:off + cout, :]                    # (cout, 1)

        for b in range(nb):   # statically unrolled sub-batch (overhead amortization)
            skip = skip_ref[b].astype(f32)                     # (Cs, Ps)
            cur = cur_ref[b].astype(f32)                       # (Cc, Pc)

            # skip_conv = DoubleResConv(skip): GELU(conv3x3(x) + b + x), twice
            s1 = gelu(conv3x3(skip, Cs, OW_S1, Cs) + bias(OB_S1, Cs) + skip)
            s2 = gelu(conv3x3(s1, Cs, OW_S2, Cs) + bias(OB_S2, Cs) + s1)

            # bilinear upsample (align_corners=True): one channel-independent
            # spatial-operator matmul.  TODO(synk): separable form at scale.
            cur_up = jnp.dot(cur, m2t_ref[...], preferred_element_type=f32)

            # cat([cur_up, s2], channel) + 3x3 reduce conv (bias=False) + GELU,
            # as one K = 9*(Cc+Cs) matmul over the in-kernel channel concat.
            x = gelu(conv3x3(jnp.concatenate([cur_up, s2], axis=0),
                             Ccat, OW_RED, Cd))

            # fusion_conv = DoubleResConv(x)
            f1 = gelu(conv3x3(x, Cd, OW_F1, Cd) + bias(OB_F1, Cd) + x)
            f2 = gelu(conv3x3(f1, Cd, OW_F2, Cd) + bias(OB_F2, Cd) + f1)

            out_ref[b] = f2.astype(out_ref.dtype)

    return kernel


# ----------------------------------------------------------------------------
# Wrapper: layout prep (lane-dense (C, H*W), channels padded to 8), constant
# packing, grid construction.
# ----------------------------------------------------------------------------
def _pad_axis(x, n, axis):
    if x.shape[axis] >= n:
        return x
    pad = [(0, 0)] * x.ndim
    pad[axis] = (0, n - x.shape[axis])
    return jnp.pad(x, pad)


def _flat_taps(w_hwio, cout_p):
    # (3,3,Cin,Cout) HWIO (Cin already padded) -> (cout_p, 9*Cin),
    # column index = (ky*3+kx)*Cin + cin -- matches the in-kernel tap stacking.
    w = _pad_axis(w_hwio, cout_p, 3)
    return jnp.transpose(w, (3, 0, 1, 2)).reshape(cout_p, -1)


def upsample_forward(params, cur_x, skip_x):
    """Fused Pallas forward of the refiner UpSample block. Inputs/outputs NCHW."""
    N, Ccur, Hc, Wc = cur_x.shape
    _, Cskip, Hs, Ws = skip_x.shape
    dec_c = params["red_w"].shape[-1]
    Pc, Ps = Hc * Wc, Hs * Ws

    Cc_p, Cs_p, Cd_p = _round_up(Ccur), _round_up(Cskip), _round_up(dec_c)
    cmax_in = max(Cs_p, Cc_p + Cs_p, Cd_p)

    # Channel-independent spatial bilinear operator (Pc, Ps) and pre-broadcast
    # tap masks -- built once at trace time (numpy), constant-folded by XLA.
    wh = _interp_matrix_align_corners(Hs, Hc)
    ww = _interp_matrix_align_corners(Ws, Wc)
    m2t = jnp.asarray(np.kron(wh, ww).T)                               # (Pc, Ps)
    masks = jnp.asarray(np.broadcast_to(_tap_masks(Hs, Ws),
                                        (9, cmax_in, Ps)).copy())      # (9, Cmax, Ps)

    # Pack the 5 tap-flattened, channel-padded conv weights into one array and
    # the 4 biases into another (operand consolidation: 12 constants -> 4).
    pad_ci = lambda w, n: _pad_axis(w, n, 2)
    w_list = [
        _flat_taps(pad_ci(params["skip_w1"], Cs_p), Cs_p),
        _flat_taps(pad_ci(params["skip_w2"], Cs_p), Cs_p),
        _flat_taps(jnp.concatenate(
            [pad_ci(params["red_w"][:, :, :Ccur, :], Cc_p),
             pad_ci(params["red_w"][:, :, Ccur:, :], Cs_p)], axis=2), Cd_p),
        _flat_taps(pad_ci(params["fus_w1"], Cd_p), Cd_p),
        _flat_taps(pad_ci(params["fus_w2"], Cd_p), Cd_p),
    ]
    kmax = max(w.shape[1] for w in w_list)
    w_pack = jnp.concatenate([_pad_axis(w, kmax, 1) for w in w_list], axis=0)
    b_pack = jnp.concatenate([
        _pad_axis(params["skip_b1"].reshape(-1, 1), Cs_p, 0),
        _pad_axis(params["skip_b2"].reshape(-1, 1), Cs_p, 0),
        _pad_axis(params["fus_b1"].reshape(-1, 1), Cd_p, 0),
        _pad_axis(params["fus_b2"].reshape(-1, 1), Cd_p, 0),
    ], axis=0)

    # NCHW flattened to (N, C, H*W): spatial lands on lanes, channels padded
    # to sublane multiples (padded rows stay exactly zero through all stages).
    cur_flat = _pad_axis(cur_x.reshape(N, Ccur, Pc), Cc_p, 1)
    skip_flat = _pad_axis(skip_x.reshape(N, Cskip, Ps), Cs_p, 1)

    nb = _pick_batch_block(N)
    grid_n = N // nb

    def const_spec(shape):
        return pl.BlockSpec(shape, lambda n: (0,) * len(shape))

    out = pl.pallas_call(
        _make_fused_kernel(Hs, Ws, Cc_p, Cs_p, Cd_p, nb),
        out_shape=jax.ShapeDtypeStruct((N, Cd_p, Ps), cur_x.dtype),
        grid=(grid_n,),
        in_specs=[
            pl.BlockSpec((nb, Cc_p, Pc), lambda n: (n, 0, 0)),
            pl.BlockSpec((nb, Cs_p, Ps), lambda n: (n, 0, 0)),
            const_spec(m2t.shape),
            const_spec(masks.shape),
            const_spec(w_pack.shape),
            const_spec(b_pack.shape),
        ],
        out_specs=pl.BlockSpec((nb, Cd_p, Ps), lambda n: (n, 0, 0)),
        compiler_params=pltpu.CompilerParams(
            dimension_semantics=("parallel",)),
    )(cur_flat, skip_flat, m2t, masks, w_pack, b_pack)
    return out[:, :dec_c, :].reshape(N, dec_c, Hs, Ws)


# ----------------------------------------------------------------------------
# Parameters
# ----------------------------------------------------------------------------
def init_upsample_params(key, skip_c, cur_c, dec_c):
    ks = jax.random.split(key, 9)
    w = lambda k, ci, co: jax.random.normal(k, (3, 3, ci, co), jnp.float32) * 0.1
    b = lambda k, c: jax.random.normal(k, (c,), jnp.float32) * 0.01
    return {
        "skip_w1": w(ks[0], skip_c, skip_c), "skip_b1": b(ks[1], skip_c),
        "skip_w2": w(ks[2], skip_c, skip_c), "skip_b2": b(ks[3], skip_c),
        "red_w":   w(ks[4], cur_c + skip_c, dec_c),           # bias=False
        "fus_w1":  w(ks[5], dec_c, dec_c), "fus_b1": b(ks[6], dec_c),
        "fus_w2":  w(ks[7], dec_c, dec_c), "fus_b2": b(ks[8], dec_c),
    }


# ----------------------------------------------------------------------------
# Pure-JAX reference (exact erf GELU, HIGHEST matmul precision)
# ----------------------------------------------------------------------------
def _ref_conv3x3_gelu(x, w, b=None, res=None):
    out = jax.lax.conv_general_dilated(
        x, w, window_strides=(1, 1), padding="SAME",
        dimension_numbers=("NHWC", "HWIO", "NHWC"), precision=_EXACT)
    if b is not None:
        out = out + b.reshape(1, 1, 1, -1)
    if res is not None:
        out = out + res
    return jax.nn.gelu(out, approximate=False)    # exact erf GELU (torch.nn.GELU())


def _ref_forward(params, cur_x, skip_x):
    cur = jnp.transpose(cur_x, (0, 2, 3, 1))
    skip = jnp.transpose(skip_x, (0, 2, 3, 1))
    s = _ref_conv3x3_gelu(skip, params["skip_w1"], params["skip_b1"], skip)
    s = _ref_conv3x3_gelu(s, params["skip_w2"], params["skip_b2"], s)
    Hs, Ws = s.shape[1], s.shape[2]
    wh = jnp.asarray(_interp_matrix_align_corners(Hs, cur.shape[1]))
    ww = jnp.asarray(_interp_matrix_align_corners(Ws, cur.shape[2]))
    cu = jnp.einsum("ip,npqc->niqc", wh, cur, precision=_EXACT)
    cu = jnp.einsum("jq,niqc->nijc", ww, cu, precision=_EXACT)
    x = jnp.concatenate([cu, s], axis=-1)
    x = _ref_conv3x3_gelu(x, params["red_w"])
    y = _ref_conv3x3_gelu(x, params["fus_w1"], params["fus_b1"], x)
    y = _ref_conv3x3_gelu(y, params["fus_w2"], params["fus_b2"], y)
    return jnp.transpose(y, (0, 3, 1, 2))


if __name__ == "__main__":
    key = jax.random.PRNGKey(0)
    k_cur, k_skip, k_param = jax.random.split(key, 3)

    skip_c, cur_c, dec_c = 4, 4, 8
    cur_x = jax.random.normal(k_cur, (2, cur_c, 8, 8), jnp.float32)       # NCHW
    skip_x = jax.random.normal(k_skip, (2, skip_c, 16, 16), jnp.float32)  # NCHW

    params = init_upsample_params(k_param, skip_c, cur_c, dec_c)

    out = jax.jit(upsample_forward)(params, cur_x, skip_x)
    out = jax.block_until_ready(out)
    assert out.shape == (2, dec_c, 16, 16), out.shape

    # Tolerance re-validated for DEFAULT (single bf16 pass) matmul precision
    # and the tanh-approx GELU (exact-erf reference): errors stay ~1e-2.
    ref = _ref_forward(params, cur_x, skip_x)
    np.testing.assert_allclose(np.asarray(out), np.asarray(ref), rtol=2e-2, atol=2e-2)

    print("KERNEL_OK")
</pallas_src>

<mosaic_0001>
module attributes {stable_mosaic.version = 11 : i64} {
  func.func @kernel(%arg0: i32, %arg1: memref<1x8x64xf32, #tpu.memory_space<vmem>>, %arg2: memref<1x8x256xf32, #tpu.memory_space<vmem>>, %arg3: memref<64x256xf32, #tpu.memory_space<vmem>>, %arg4: memref<9x16x256xf32, #tpu.memory_space<vmem>>, %arg5: memref<40x144xf32, #tpu.memory_space<vmem>>, %arg6: memref<32x1xf32, #tpu.memory_space<vmem>>, %arg7: memref<1x8x256xf32, #tpu.memory_space<vmem>>) attributes {dimension_semantics = [#tpu.dimension_semantics<parallel>], iteration_bounds = array<i64: 2>, scalar_prefetch = 0 : i64, scratch_operands = 0 : i64, tpu.core_type = #tpu.core_type<tc>, window_params = [{transform_indices = @transform_0, window_bounds = array<i64: 1, 8, 64>}, {transform_indices = @transform_1, window_bounds = array<i64: 1, 8, 256>}, {pipeline_mode = #tpu.pipeline_mode<synchronous>, transform_indices = @transform_2, window_bounds = array<i64: 64, 256>}, {pipeline_mode = #tpu.pipeline_mode<synchronous>, transform_indices = @transform_3, window_bounds = array<i64: 9, 16, 256>}, {pipeline_mode = #tpu.pipeline_mode<synchronous>, transform_indices = @transform_4, window_bounds = array<i64: 40, 144>}, {pipeline_mode = #tpu.pipeline_mode<synchronous>, transform_indices = @transform_5, window_bounds = array<i64: 32, 1>}, {transform_indices = @transform_6, window_bounds = array<i64: 1, 8, 256>}]} {
    %c0 = arith.constant 0 : index
    %c0_0 = arith.constant 0 : index
    %c0_1 = arith.constant 0 : index
    %0 = vector.load %arg2[%c0, %c0_0, %c0_1] : memref<1x8x256xf32, #tpu.memory_space<vmem>>, vector<1x8x256xf32>
    %1 = vector.shape_cast %0 : vector<1x8x256xf32> to vector<8x256xf32>
    %c0_2 = arith.constant 0 : index
    %c0_3 = arith.constant 0 : index
    %c0_4 = arith.constant 0 : index
    %2 = vector.load %arg1[%c0_2, %c0_3, %c0_4] : memref<1x8x64xf32, #tpu.memory_space<vmem>>, vector<1x8x64xf32>
    %3 = vector.shape_cast %2 : vector<1x8x64xf32> to vector<8x64xf32>
    %c17_i32 = arith.constant 17 : i32
    %4 = tpu.dynamic_rotate %1 by %c17_i32 dim 1 : vector<8x256xf32>, i32 -> vector<8x256xf32>
    %c0_5 = arith.constant 0 : index
    %c0_6 = arith.constant 0 : index
    %c0_7 = arith.constant 0 : index
    %5 = vector.load %arg4[%c0_5, %c0_6, %c0_7] : memref<9x16x256xf32, #tpu.memory_space<vmem>>, vector<1x8x256xf32>
    %6 = vector.shape_cast %5 : vector<1x8x256xf32> to vector<8x256xf32>
    %7 = arith.mulf %4, %6 : vector<8x256xf32>
    %c16_i32 = arith.constant 16 : i32
    %8 = tpu.dynamic_rotate %1 by %c16_i32 dim 1 : vector<8x256xf32>, i32 -> vector<8x256xf32>
    %c1 = arith.constant 1 : index
    %c0_8 = arith.constant 0 : index
    %c0_9 = arith.constant 0 : index
    %9 = vector.load %arg4[%c1, %c0_8, %c0_9] : memref<9x16x256xf32, #tpu.memory_space<vmem>>, vector<1x8x256xf32>
    %10 = vector.shape_cast %9 : vector<1x8x256xf32> to vector<8x256xf32>
    %11 = arith.mulf %8, %10 : vector<8x256xf32>
    %c15_i32 = arith.constant 15 : i32
    %12 = tpu.dynamic_rotate %1 by %c15_i32 dim 1 : vector<8x256xf32>, i32 -> vector<8x256xf32>
    %c2 = arith.constant 2 : index
    %c0_10 = arith.constant 0 : index
    %c0_11 = arith.constant 0 : index
    %13 = vector.load %arg4[%c2, %c0_10, %c0_11] : memref<9x16x256xf32, #tpu.memory_space<vmem>>, vector<1x8x256xf32>
    %14 = vector.shape_cast %13 : vector<1x8x256xf32> to vector<8x256xf32>
    %15 = arith.mulf %12, %14 : vector<8x256xf32>
    %c1_i32 = arith.constant 1 : i32
    %16 = tpu.dynamic_rotate %1 by %c1_i32 dim 1 : vector<8x256xf32>, i32 -> vector<8x256xf32>
    %c3 = arith.constant 3 : index
    %c0_12 = arith.constant 0 : index
    %c0_13 = arith.constant 0 : index
    %17 = vector.load %arg4[%c3, %c0_12, %c0_13] : memref<9x16x256xf32, #tpu.memory_space<vmem>>, vector<1x8x256xf32>
    %18 = vector.shape_cast %17 : vector<1x8x256xf32> to vector<8x256xf32>
    %19 = arith.mulf %16, %18 : vector<8x256xf32>
    %c255_i32 = arith.constant 255 : i32
    %20 = tpu.dynamic_rotate %1 by %c255_i32 dim 1 : vector<8x256xf32>, i32 -> vector<8x256xf32>
    %c5 = arith.constant 5 : index
    %c0_14 = arith.constant 0 : index
    %c0_15 = arith.constant 0 : index
    %21 = vector.load %arg4[%c5, %c0_14, %c0_15] : memref<9x16x256xf32, #tpu.memory_space<vmem>>, vector<1x8x256xf32>
    %22 = vector.shape_cast %21 : vector<1x8x256xf32> to vector<8x256xf32>
    %23 = arith.mulf %20, %22 : vector<8x256xf32>
    %c241_i32 = arith.constant 241 : i32
    %24 = tpu.dynamic_rotate %1 by %c241_i32 dim 1 : vector<8x256xf32>, i32 -> vector<8x256xf32>
    %c6 = arith.constant 6 : index
    %c0_16 = arith.constant 0 : index
    %c0_17 = arith.constant 0 : index
    %25 = vector.load %arg4[%c6, %c0_16, %c0_17] : memref<9x16x256xf32, #tpu.memory_space<vmem>>, vector<1x8x256xf32>
    %26 = vector.shape_cast %25 : vector<1x8x256xf32> to vector<8x256xf32>
    %27 = arith.mulf %24, %26 : vector<8x256xf32>
    %c240_i32 = arith.constant 240 : i32
    %28 = tpu.dynamic_rotate %1 by %c240_i32 dim 1 : vector<8x256xf32>, i32 -> vector<8x256xf32>
    %c7 = arith.constant 7 : index
    %c0_18 = arith.constant 0 : index
    %c0_19 = arith.constant 0 : index
    %29 = vector.load %arg4[%c7, %c0_18, %c0_19] : memref<9x16x256xf32, #tpu.memory_space<vmem>>, vector<1x8x256xf32>
    %30 = vector.shape_cast %29 : vector<1x8x256xf32> to vector<8x256xf32>
    %31 = arith.mulf %28, %30 : vector<8x256xf32>
    %c239_i32 = arith.constant 239 : i32
    %32 = tpu.dynamic_rotate %1 by %c239_i32 dim 1 : vector<8x256xf32>, i32 -> vector<8x256xf32>
    %c8 = arith.constant 8 : index
    %c0_20 = arith.constant 0 : index
    %c0_21 = arith.constant 0 : index
    %33 = vector.load %arg4[%c8, %c0_20, %c0_21] : memref<9x16x256xf32, #tpu.memory_space<vmem>>, vector<1x8x256xf32>
    %34 = vector.shape_cast %33 : vector<1x8x256xf32> to vector<8x256xf32>
    %35 = arith.mulf %32, %34 : vector<8x256xf32>
    %36 = tpu.concatenate %7, %11, %15, %19, %1, %23, %27, %31, %35 in 0 : vector<8x256xf32>, vector<8x256xf32>, vector<8x256xf32>, vector<8x256xf32>, vector<8x256xf32>, vector<8x256xf32>, vector<8x256xf32>, vector<8x256xf32>, vector<8x256xf32> -> vector<72x256xf32>
    %c0_22 = arith.constant 0 : index
    %c0_23 = arith.constant 0 : index
    %37 = vector.load %arg5[%c0_22, %c0_23] : memref<40x144xf32, #tpu.memory_space<vmem>>, vector<8x72xf32>
    %cst = arith.constant dense<0.000000e+00> : vector<8x256xf32>
    %38 = tpu.matmul %37, %36, %cst {dimension_numbers = #tpu.dot_dimension_numbers<[1], [0], [0], [1], [0, 0, 1, 1], [], []>} : vector<8x72xf32>, vector<72x256xf32>, vector<8x256xf32> -> vector<8x256xf32>
    %c0_24 = arith.constant 0 : index
    %c0_25 = arith.constant 0 : index
    %39 = vector.load %arg6[%c0_24, %c0_25] : memref<32x1xf32, #tpu.memory_space<vmem>>, vector<8x1xf32>
    %40 = vector.broadcast %39 : vector<8x1xf32> to vector<8x256xf32>
    %41 = arith.addf %38, %40 : vector<8x256xf32>
    %42 = arith.addf %41, %1 : vector<8x256xf32>
    %cst_26 = arith.constant 5.000000e-01 : f32
    %43 = vector.broadcast %cst_26 : f32 to vector<8x256xf32>
    %44 = arith.mulf %43, %42 : vector<8x256xf32>
    %45 = arith.mulf %42, %42 : vector<8x256xf32>
    %46 = arith.mulf %45, %42 : vector<8x256xf32>
    %cst_27 = arith.constant 4.471500e-02 : f32
    %47 = vector.broadcast %cst_27 : f32 to vector<8x256xf32>
    %48 = arith.mulf %47, %46 : vector<8x256xf32>
    %49 = arith.addf %42, %48 : vector<8x256xf32>
    %cst_28 = arith.constant 0.797884583 : f32
    %50 = vector.broadcast %cst_28 : f32 to vector<8x256xf32>
    %51 = arith.mulf %50, %49 : vector<8x256xf32>
    %52 = math.tanh %51 : vector<8x256xf32>
    %cst_29 = arith.constant 1.000000e+00 : f32
    %53 = vector.broadcast %cst_29 : f32 to vector<8x256xf32>
    %54 = arith.addf %53, %52 : vector<8x256xf32>
    %55 = arith.mulf %44, %54 : vector<8x256xf32>
    %c17_i32_30 = arith.constant 17 : i32
    %56 = tpu.dynamic_rotate %55 by %c17_i32_30 dim 1 : vector<8x256xf32>, i32 -> vector<8x256xf32>
    %c0_31 = arith.constant 0 : index
    %c0_32 = arith.constant 0 : index
    %c0_33 = arith.constant 0 : index
    %57 = vector.load %arg4[%c0_31, %c0_32, %c0_33] : memref<9x16x256xf32, #tpu.memory_space<vmem>>, vector<1x8x256xf32>
    %58 = vector.shape_cast %57 : vector<1x8x256xf32> to vector<8x256xf32>
    %59 = arith.mulf %56, %58 : vector<8x256xf32>
    %c16_i32_34 = arith.constant 16 : i32
    %60 = tpu.dynamic_rotate %55 by %c16_i32_34 dim 1 : vector<8x256xf32>, i32 -> vector<8x256xf32>
    %c1_35 = arith.constant 1 : index
    %c0_36 = arith.constant 0 : index
    %c0_37 = arith.constant 0 : index
    %61 = vector.load %arg4[%c1_35, %c0_36, %c0_37] : memref<9x16x256xf32, #tpu.memory_space<vmem>>, vector<1x8x256xf32>
    %62 = vector.shape_cast %61 : vector<1x8x256xf32> to vector<8x256xf32>
    %63 = arith.mulf %60, %62 : vector<8x256xf32>
    %c15_i32_38 = arith.constant 15 : i32
    %64 = tpu.dynamic_rotate %55 by %c15_i32_38 dim 1 : vector<8x256xf32>, i32 -> vector<8x256xf32>
    %c2_39 = arith.constant 2 : index
    %c0_40 = arith.constant 0 : index
    %c0_41 = arith.constant 0 : index
    %65 = vector.load %arg4[%c2_39, %c0_40, %c0_41] : memref<9x16x256xf32, #tpu.memory_space<vmem>>, vector<1x8x256xf32>
    %66 = vector.shape_cast %65 : vector<1x8x256xf32> to vector<8x256xf32>
    %67 = arith.mulf %64, %66 : vector<8x256xf32>
    %c1_i32_42 = arith.constant 1 : i32
    %68 = tpu.dynamic_rotate %55 by %c1_i32_42 dim 1 : vector<8x256xf32>, i32 -> vector<8x256xf32>
    %c3_43 = arith.constant 3 : index
    %c0_44 = arith.constant 0 : index
    %c0_45 = arith.constant 0 : index
    %69 = vector.load %arg4[%c3_43, %c0_44, %c0_45] : memref<9x16x256xf32, #tpu.memory_space<vmem>>, vector<1x8x256xf32>
    %70 = vector.shape_cast %69 : vector<1x8x256xf32> to vector<8x256xf32>
    %71 = arith.mulf %68, %70 : vector<8x256xf32>
    %c255_i32_46 = arith.constant 255 : i32
    %72 = tpu.dynamic_rotate %55 by %c255_i32_46 dim 1 : vector<8x256xf32>, i32 -> vector<8x256xf32>
    %c5_47 = arith.constant 5 : index
    %c0_48 = arith.constant 0 : index
    %c0_49 = arith.constant 0 : index
    %73 = vector.load %arg4[%c5_47, %c0_48, %c0_49] : memref<9x16x256xf32, #tpu.memory_space<vmem>>, vector<1x8x256xf32>
    %74 = vector.shape_cast %73 : vector<1x8x256xf32> to vector<8x256xf32>
    %75 = arith.mulf %72, %74 : vector<8x256xf32>
    %c241_i32_50 = arith.constant 241 : i32
    %76 = tpu.dynamic_rotate %55 by %c241_i32_50 dim 1 : vector<8x256xf32>, i32 -> vector<8x256xf32>
    %c6_51 = arith.constant 6 : index
    %c0_52 = arith.constant 0 : index
    %c0_53 = arith.constant 0 : index
    %77 = vector.load %arg4[%c6_51, %c0_52, %c0_53] : memref<9x16x256xf32, #tpu.memory_space<vmem>>, vector<1x8x256xf32>
    %78 = vector.shape_cast %77 : vector<1x8x256xf32> to vector<8x256xf32>
    %79 = arith.mulf %76, %78 : vector<8x256xf32>
    %c240_i32_54 = arith.constant 240 : i32
    %80 = tpu.dynamic_rotate %55 by %c240_i32_54 dim 1 : vector<8x256xf32>, i32 -> vector<8x256xf32>
    %c7_55 = arith.constant 7 : index
    %c0_56 = arith.constant 0 : index
    %c0_57 = arith.constant 0 : index
    %81 = vector.load %arg4[%c7_55, %c0_56, %c0_57] : memref<9x16x256xf32, #tpu.memory_space<vmem>>, vector<1x8x256xf32>
    %82 = vector.shape_cast %81 : vector<1x8x256xf32> to vector<8x256xf32>
    %83 = arith.mulf %80, %82 : vector<8x256xf32>
    %c239_i32_58 = arith.constant 239 : i32
    %84 = tpu.dynamic_rotate %55 by %c239_i32_58 dim 1 : vector<8x256xf32>, i32 -> vector<8x256xf32>
    %c8_59 = arith.constant 8 : index
    %c0_60 = arith.constant 0 : index
    %c0_61 = arith.constant 0 : index
    %85 = vector.load %arg4[%c8_59, %c0_60, %c0_61] : memref<9x16x256xf32, #tpu.memory_space<vmem>>, vector<1x8x256xf32>
    %86 = vector.shape_cast %85 : vector<1x8x256xf32> to vector<8x256xf32>
    %87 = arith.mulf %84, %86 : vector<8x256xf32>
    %88 = tpu.concatenate %59, %63, %67, %71, %55, %75, %79, %83, %87 in 0 : vector<8x256xf32>, vector<8x256xf32>, vector<8x256xf32>, vector<8x256xf32>, vector<8x256xf32>, vector<8x256xf32>, vector<8x256xf32>, vector<8x256xf32>, vector<8x256xf32> -> vector<72x256xf32>
    %c8_62 = arith.constant 8 : index
    %c0_63 = arith.constant 0 : index
    %89 = vector.load %arg5[%c8_62, %c0_63] : memref<40x144xf32, #tpu.memory_space<vmem>>, vector<8x72xf32>
    %cst_64 = arith.constant dense<0.000000e+00> : vector<8x256xf32>
    %90 = tpu.matmul %89, %88, %cst_64 {dimension_numbers = #tpu.dot_dimension_numbers<[1], [0], [0], [1], [0, 0, 1, 1], [], []>} : vector<8x72xf32>, vector<72x256xf32>, vector<8x256xf32> -> vector<8x256xf32>
    %c8_65 = arith.constant 8 : index
    %c0_66 = arith.constant 0 : index
    %91 = vector.load %arg6[%c8_65, %c0_66] : memref<32x1xf32, #tpu.memory_space<vmem>>, vector<8x1xf32>
    %92 = vector.broadcast %91 : vector<8x1xf32> to vector<8x256xf32>
    %93 = arith.addf %90, %92 : vector<8x256xf32>
    %94 = arith.addf %93, %55 : vector<8x256xf32>
    %cst_67 = arith.constant 5.000000e-01 : f32
    %95 = vector.broadcast %cst_67 : f32 to vector<8x256xf32>
    %96 = arith.mulf %95, %94 : vector<8x256xf32>
    %97 = arith.mulf %94, %94 : vector<8x256xf32>
    %98 = arith.mulf %97, %94 : vector<8x256xf32>
    %cst_68 = arith.constant 4.471500e-02 : f32
    %99 = vector.broadcast %cst_68 : f32 to vector<8x256xf32>
    %100 = arith.mulf %99, %98 : vector<8x256xf32>
    %101 = arith.addf %94, %100 : vector<8x256xf32>
    %cst_69 = arith.constant 0.797884583 : f32
    %102 = vector.broadcast %cst_69 : f32 to vector<8x256xf32>
    %103 = arith.mulf %102, %101 : vector<8x256xf32>
    %104 = math.tanh %103 : vector<8x256xf32>
    %cst_70 = arith.constant 1.000000e+00 : f32
    %105 = vector.broadcast %cst_70 : f32 to vector<8x256xf32>
    %106 = arith.addf %105, %104 : vector<8x256xf32>
    %107 = arith.mulf %96, %106 : vector<8x256xf32>
    %c0_71 = arith.constant 0 : index
    %c0_72 = arith.constant 0 : index
    %108 = vector.load %arg3[%c0_71, %c0_72] : memref<64x256xf32, #tpu.memory_space<vmem>>, vector<64x256xf32>
    %cst_73 = arith.constant dense<0.000000e+00> : vector<8x256xf32>
    %109 = tpu.matmul %3, %108, %cst_73 {dimension_numbers = #tpu.dot_dimension_numbers<[1], [0], [0], [1], [0, 0, 1, 1], [], []>} : vector<8x64xf32>, vector<64x256xf32>, vector<8x256xf32> -> vector<8x256xf32>
    %110 = tpu.concatenate %109, %107 in 0 : vector<8x256xf32>, vector<8x256xf32> -> vector<16x256xf32>
    %c17_i32_74 = arith.constant 17 : i32
    %111 = tpu.dynamic_rotate %110 by %c17_i32_74 dim 1 : vector<16x256xf32>, i32 -> vector<16x256xf32>
    %c0_75 = arith.constant 0 : index
    %c0_76 = arith.constant 0 : index
    %c0_77 = arith.constant 0 : index
    %112 = vector.load %arg4[%c0_75, %c0_76, %c0_77] : memref<9x16x256xf32, #tpu.memory_space<vmem>>, vector<1x16x256xf32>
    %113 = vector.shape_cast %112 : vector<1x16x256xf32> to vector<16x256xf32>
    %114 = arith.mulf %111, %113 : vector<16x256xf32>
    %c16_i32_78 = arith.constant 16 : i32
    %115 = tpu.dynamic_rotate %110 by %c16_i32_78 dim 1 : vector<16x256xf32>, i32 -> vector<16x256xf32>
    %c1_79 = arith.constant 1 : index
    %c0_80 = arith.constant 0 : index
    %c0_81 = arith.constant 0 : index
    %116 = vector.load %arg4[%c1_79, %c0_80, %c0_81] : memref<9x16x256xf32, #tpu.memory_space<vmem>>, vector<1x16x256xf32>
    %117 = vector.shape_cast %116 : vector<1x16x256xf32> to vector<16x256xf32>
    %118 = arith.mulf %115, %117 : vector<16x256xf32>
    %c15_i32_82 = arith.constant 15 : i32
    %119 = tpu.dynamic_rotate %110 by %c15_i32_82 dim 1 : vector<16x256xf32>, i32 -> vector<16x256xf32>
    %c2_83 = arith.constant 2 : index
    %c0_84 = arith.constant 0 : index
    %c0_85 = arith.constant 0 : index
    %120 = vector.load %arg4[%c2_83, %c0_84, %c0_85] : memref<9x16x256xf32, #tpu.memory_space<vmem>>, vector<1x16x256xf32>
    %121 = vector.shape_cast %120 : vector<1x16x256xf32> to vector<16x256xf32>
    %122 = arith.mulf %119, %121 : vector<16x256xf32>
    %c1_i32_86 = arith.constant 1 : i32
    %123 = tpu.dynamic_rotate %110 by %c1_i32_86 dim 1 : vector<16x256xf32>, i32 -> vector<16x256xf32>
    %c3_87 = arith.constant 3 : index
    %c0_88 = arith.constant 0 : index
    %c0_89 = arith.constant 0 : index
    %124 = vector.load %arg4[%c3_87, %c0_88, %c0_89] : memref<9x16x256xf32, #tpu.memory_space<vmem>>, vector<1x16x256xf32>
    %125 = vector.shape_cast %124 : vector<1x16x256xf32> to vector<16x256xf32>
    %126 = arith.mulf %123, %125 : vector<16x256xf32>
    %c255_i32_90 = arith.constant 255 : i32
    %127 = tpu.dynamic_rotate %110 by %c255_i32_90 dim 1 : vector<16x256xf32>, i32 -> vector<16x256xf32>
    %c5_91 = arith.constant 5 : index
    %c0_92 = arith.constant 0 : index
    %c0_93 = arith.constant 0 : index
    %128 = vector.load %arg4[%c5_91, %c0_92, %c0_93] : memref<9x16x256xf32, #tpu.memory_space<vmem>>, vector<1x16x256xf32>
    %129 = vector.shape_cast %128 : vector<1x16x256xf32> to vector<16x256xf32>
    %130 = arith.mulf %127, %129 : vector<16x256xf32>
    %c241_i32_94 = arith.constant 241 : i32
    %131 = tpu.dynamic_rotate %110 by %c241_i32_94 dim 1 : vector<16x256xf32>, i32 -> vector<16x256xf32>
    %c6_95 = arith.constant 6 : index
    %c0_96 = arith.constant 0 : index
    %c0_97 = arith.constant 0 : index
    %132 = vector.load %arg4[%c6_95, %c0_96, %c0_97] : memref<9x16x256xf32, #tpu.memory_space<vmem>>, vector<1x16x256xf32>
    %133 = vector.shape_cast %132 : vector<1x16x256xf32> to vector<16x256xf32>
    %134 = arith.mulf %131, %133 : vector<16x256xf32>
    %c240_i32_98 = arith.constant 240 : i32
    %135 = tpu.dynamic_rotate %110 by %c240_i32_98 dim 1 : vector<16x256xf32>, i32 -> vector<16x256xf32>
    %c7_99 = arith.constant 7 : index
    %c0_100 = arith.constant 0 : index
    %c0_101 = arith.constant 0 : index
    %136 = vector.load %arg4[%c7_99, %c0_100, %c0_101] : memref<9x16x256xf32, #tpu.memory_space<vmem>>, vector<1x16x256xf32>
    %137 = vector.shape_cast %136 : vector<1x16x256xf32> to vector<16x256xf32>
    %138 = arith.mulf %135, %137 : vector<16x256xf32>
    %c239_i32_102 = arith.constant 239 : i32
    %139 = tpu.dynamic_rotate %110 by %c239_i32_102 dim 1 : vector<16x256xf32>, i32 -> vector<16x256xf32>
    %c8_103 = arith.constant 8 : index
    %c0_104 = arith.constant 0 : index
    %c0_105 = arith.constant 0 : index
    %140 = vector.load %arg4[%c8_103, %c0_104, %c0_105] : memref<9x16x256xf32, #tpu.memory_space<vmem>>, vector<1x16x256xf32>
    %141 = vector.shape_cast %140 : vector<1x16x256xf32> to vector<16x256xf32>
    %142 = arith.mulf %139, %141 : vector<16x256xf32>
    %143 = tpu.concatenate %114, %118, %122, %126, %110, %130, %134, %138, %142 in 0 : vector<16x256xf32>, vector<16x256xf32>, vector<16x256xf32>, vector<16x256xf32>, vector<16x256xf32>, vector<16x256xf32>, vector<16x256xf32>, vector<16x256xf32>, vector<16x256xf32> -> vector<144x256xf32>
    %c16 = arith.constant 16 : index
    %c0_106 = arith.constant 0 : index
    %144 = vector.load %arg5[%c16, %c0_106] : memref<40x144xf32, #tpu.memory_space<vmem>>, vector<8x144xf32>
    %cst_107 = arith.constant dense<0.000000e+00> : vector<8x256xf32>
    %145 = tpu.matmul %144, %143, %cst_107 {dimension_numbers = #tpu.dot_dimension_numbers<[1], [0], [0], [1], [0, 0, 1, 1], [], []>} : vector<8x144xf32>, vector<144x256xf32>, vector<8x256xf32> -> vector<8x256xf32>
    %cst_108 = arith.constant 5.000000e-01 : f32
    %146 = vector.broadcast %cst_108 : f32 to vector<8x256xf32>
    %147 = arith.mulf %146, %145 : vector<8x256xf32>
    %148 = arith.mulf %145, %145 : vector<8x256xf32>
    %149 = arith.mulf %148, %145 : vector<8x256xf32>
    %cst_109 = arith.constant 4.471500e-02 : f32
    %150 = vector.broadcast %cst_109 : f32 to vector<8x256xf32>
    %151 = arith.mulf %150, %149 : vector<8x256xf32>
    %152 = arith.addf %145, %151 : vector<8x256xf32>
    %cst_110 = arith.constant 0.797884583 : f32
    %153 = vector.broadcast %cst_110 : f32 to vector<8x256xf32>
    %154 = arith.mulf %153, %152 : vector<8x256xf32>
    %155 = math.tanh %154 : vector<8x256xf32>
    %cst_111 = arith.constant 1.000000e+00 : f32
    %156 = vector.broadcast %cst_111 : f32 to vector<8x256xf32>
    %157 = arith.addf %156, %155 : vector<8x256xf32>
    %158 = arith.mulf %147, %157 : vector<8x256xf32>
    %c17_i32_112 = arith.constant 17 : i32
    %159 = tpu.dynamic_rotate %158 by %c17_i32_112 dim 1 : vector<8x256xf32>, i32 -> vector<8x256xf32>
    %c0_113 = arith.constant 0 : index
    %c0_114 = arith.constant 0 : index
    %c0_115 = arith.constant 0 : index
    %160 = vector.load %arg4[%c0_113, %c0_114, %c0_115] : memref<9x16x256xf32, #tpu.memory_space<vmem>>, vector<1x8x256xf32>
    %161 = vector.shape_cast %160 : vector<1x8x256xf32> to vector<8x256xf32>
    %162 = arith.mulf %159, %161 : vector<8x256xf32>
    %c16_i32_116 = arith.constant 16 : i32
    %163 = tpu.dynamic_rotate %158 by %c16_i32_116 dim 1 : vector<8x256xf32>, i32 -> vector<8x256xf32>
    %c1_117 = arith.constant 1 : index
    %c0_118 = arith.constant 0 : index
    %c0_119 = arith.constant 0 : index
    %164 = vector.load %arg4[%c1_117, %c0_118, %c0_119] : memref<9x16x256xf32, #tpu.memory_space<vmem>>, vector<1x8x256xf32>
    %165 = vector.shape_cast %164 : vector<1x8x256xf32> to vector<8x256xf32>
    %166 = arith.mulf %163, %165 : vector<8x256xf32>
    %c15_i32_120 = arith.constant 15 : i32
    %167 = tpu.dynamic_rotate %158 by %c15_i32_120 dim 1 : vector<8x256xf32>, i32 -> vector<8x256xf32>
    %c2_121 = arith.constant 2 : index
    %c0_122 = arith.constant 0 : index
    %c0_123 = arith.constant 0 : index
    %168 = vector.load %arg4[%c2_121, %c0_122, %c0_123] : memref<9x16x256xf32, #tpu.memory_space<vmem>>, vector<1x8x256xf32>
    %169 = vector.shape_cast %168 : vector<1x8x256xf32> to vector<8x256xf32>
    %170 = arith.mulf %167, %169 : vector<8x256xf32>
    %c1_i32_124 = arith.constant 1 : i32
    %171 = tpu.dynamic_rotate %158 by %c1_i32_124 dim 1 : vector<8x256xf32>, i32 -> vector<8x256xf32>
    %c3_125 = arith.constant 3 : index
    %c0_126 = arith.constant 0 : index
    %c0_127 = arith.constant 0 : index
    %172 = vector.load %arg4[%c3_125, %c0_126, %c0_127] : memref<9x16x256xf32, #tpu.memory_space<vmem>>, vector<1x8x256xf32>
    %173 = vector.shape_cast %172 : vector<1x8x256xf32> to vector<8x256xf32>
    %174 = arith.mulf %171, %173 : vector<8x256xf32>
    %c255_i32_128 = arith.constant 255 : i32
    %175 = tpu.dynamic_rotate %158 by %c255_i32_128 dim 1 : vector<8x256xf32>, i32 -> vector<8x256xf32>
    %c5_129 = arith.constant 5 : index
    %c0_130 = arith.constant 0 : index
    %c0_131 = arith.constant 0 : index
    %176 = vector.load %arg4[%c5_129, %c0_130, %c0_131] : memref<9x16x256xf32, #tpu.memory_space<vmem>>, vector<1x8x256xf32>
    %177 = vector.shape_cast %176 : vector<1x8x256xf32> to vector<8x256xf32>
    %178 = arith.mulf %175, %177 : vector<8x256xf32>
    %c241_i32_132 = arith.constant 241 : i32
    %179 = tpu.dynamic_rotate %158 by %c241_i32_132 dim 1 : vector<8x256xf32>, i32 -> vector<8x256xf32>
    %c6_133 = arith.constant 6 : index
    %c0_134 = arith.constant 0 : index
    %c0_135 = arith.constant 0 : index
    %180 = vector.load %arg4[%c6_133, %c0_134, %c0_135] : memref<9x16x256xf32, #tpu.memory_space<vmem>>, vector<1x8x256xf32>
    %181 = vector.shape_cast %180 : vector<1x8x256xf32> to vector<8x256xf32>
    %182 = arith.mulf %179, %181 : vector<8x256xf32>
    %c240_i32_136 = arith.constant 240 : i32
    %183 = tpu.dynamic_rotate %158 by %c240_i32_136 dim 1 : vector<8x256xf32>, i32 -> vector<8x256xf32>
    %c7_137 = arith.constant 7 : index
    %c0_138 = arith.constant 0 : index
    %c0_139 = arith.constant 0 : index
    %184 = vector.load %arg4[%c7_137, %c0_138, %c0_139] : memref<9x16x256xf32, #tpu.memory_space<vmem>>, vector<1x8x256xf32>
    %185 = vector.shape_cast %184 : vector<1x8x256xf32> to vector<8x256xf32>
    %186 = arith.mulf %183, %185 : vector<8x256xf32>
    %c239_i32_140 = arith.constant 239 : i32
    %187 = tpu.dynamic_rotate %158 by %c239_i32_140 dim 1 : vector<8x256xf32>, i32 -> vector<8x256xf32>
    %c8_141 = arith.constant 8 : index
    %c0_142 = arith.constant 0 : index
    %c0_143 = arith.constant 0 : index
    %188 = vector.load %arg4[%c8_141, %c0_142, %c0_143] : memref<9x16x256xf32, #tpu.memory_space<vmem>>, vector<1x8x256xf32>
    %189 = vector.shape_cast %188 : vector<1x8x256xf32> to vector<8x256xf32>
    %190 = arith.mulf %187, %189 : vector<8x256xf32>
    %191 = tpu.concatenate %162, %166, %170, %174, %158, %178, %182, %186, %190 in 0 : vector<8x256xf32>, vector<8x256xf32>, vector<8x256xf32>, vector<8x256xf32>, vector<8x256xf32>, vector<8x256xf32>, vector<8x256xf32>, vector<8x256xf32>, vector<8x256xf32> -> vector<72x256xf32>
    %c24 = arith.constant 24 : index
    %c0_144 = arith.constant 0 : index
    %192 = vector.load %arg5[%c24, %c0_144] : memref<40x144xf32, #tpu.memory_space<vmem>>, vector<8x72xf32>
    %cst_145 = arith.constant dense<0.000000e+00> : vector<8x256xf32>
    %193 = tpu.matmul %192, %191, %cst_145 {dimension_numbers = #tpu.dot_dimension_numbers<[1], [0], [0], [1], [0, 0, 1, 1], [], []>} : vector<8x72xf32>, vector<72x256xf32>, vector<8x256xf32> -> vector<8x256xf32>
    %c16_146 = arith.constant 16 : index
    %c0_147 = arith.constant 0 : index
    %194 = vector.load %arg6[%c16_146, %c0_147] : memref<32x1xf32, #tpu.memory_space<vmem>>, vector<8x1xf32>
    %195 = vector.broadcast %194 : vector<8x1xf32> to vector<8x256xf32>
    %196 = arith.addf %193, %195 : vector<8x256xf32>
    %197 = arith.addf %196, %158 : vector<8x256xf32>
    %cst_148 = arith.constant 5.000000e-01 : f32
    %198 = vector.broadcast %cst_148 : f32 to vector<8x256xf32>
    %199 = arith.mulf %198, %197 : vector<8x256xf32>
    %200 = arith.mulf %197, %197 : vector<8x256xf32>
    %201 = arith.mulf %200, %197 : vector<8x256xf32>
    %cst_149 = arith.constant 4.471500e-02 : f32
    %202 = vector.broadcast %cst_149 : f32 to vector<8x256xf32>
    %203 = arith.mulf %202, %201 : vector<8x256xf32>
    %204 = arith.addf %197, %203 : vector<8x256xf32>
    %cst_150 = arith.constant 0.797884583 : f32
    %205 = vector.broadcast %cst_150 : f32 to vector<8x256xf32>
    %206 = arith.mulf %205, %204 : vector<8x256xf32>
    %207 = math.tanh %206 : vector<8x256xf32>
    %cst_151 = arith.constant 1.000000e+00 : f32
    %208 = vector.broadcast %cst_151 : f32 to vector<8x256xf32>
    %209 = arith.addf %208, %207 : vector<8x256xf32>
    %210 = arith.mulf %199, %209 : vector<8x256xf32>
    %c17_i32_152 = arith.constant 17 : i32
    %211 = tpu.dynamic_rotate %210 by %c17_i32_152 dim 1 : vector<8x256xf32>, i32 -> vector<8x256xf32>
    %c0_153 = arith.constant 0 : index
    %c0_154 = arith.constant 0 : index
    %c0_155 = arith.constant 0 : index
    %212 = vector.load %arg4[%c0_153, %c0_154, %c0_155] : memref<9x16x256xf32, #tpu.memory_space<vmem>>, vector<1x8x256xf32>
    %213 = vector.shape_cast %212 : vector<1x8x256xf32> to vector<8x256xf32>
    %214 = arith.mulf %211, %213 : vector<8x256xf32>
    %c16_i32_156 = arith.constant 16 : i32
    %215 = tpu.dynamic_rotate %210 by %c16_i32_156 dim 1 : vector<8x256xf32>, i32 -> vector<8x256xf32>
    %c1_157 = arith.constant 1 : index
    %c0_158 = arith.constant 0 : index
    %c0_159 = arith.constant 0 : index
    %216 = vector.load %arg4[%c1_157, %c0_158, %c0_159] : memref<9x16x256xf32, #tpu.memory_space<vmem>>, vector<1x8x256xf32>
    %217 = vector.shape_cast %216 : vector<1x8x256xf32> to vector<8x256xf32>
    %218 = arith.mulf %215, %217 : vector<8x256xf32>
    %c15_i32_160 = arith.constant 15 : i32
    %219 = tpu.dynamic_rotate %210 by %c15_i32_160 dim 1 : vector<8x256xf32>, i32 -> vector<8x256xf32>
    %c2_161 = arith.constant 2 : index
    %c0_162 = arith.constant 0 : index
    %c0_163 = arith.constant 0 : index
    %220 = vector.load %arg4[%c2_161, %c0_162, %c0_163] : memref<9x16x256xf32, #tpu.memory_space<vmem>>, vector<1x8x256xf32>
    %221 = vector.shape_cast %220 : vector<1x8x256xf32> to vector<8x256xf32>
    %222 = arith.mulf %219, %221 : vector<8x256xf32>
    %c1_i32_164 = arith.constant 1 : i32
    %223 = tpu.dynamic_rotate %210 by %c1_i32_164 dim 1 : vector<8x256xf32>, i32 -> vector<8x256xf32>
    %c3_165 = arith.constant 3 : index
    %c0_166 = arith.constant 0 : index
    %c0_167 = arith.constant 0 : index
    %224 = vector.load %arg4[%c3_165, %c0_166, %c0_167] : memref<9x16x256xf32, #tpu.memory_space<vmem>>, vector<1x8x256xf32>
    %225 = vector.shape_cast %224 : vector<1x8x256xf32> to vector<8x256xf32>
    %226 = arith.mulf %223, %225 : vector<8x256xf32>
    %c255_i32_168 = arith.constant 255 : i32
    %227 = tpu.dynamic_rotate %210 by %c255_i32_168 dim 1 : vector<8x256xf32>, i32 -> vector<8x256xf32>
    %c5_169 = arith.constant 5 : index
    %c0_170 = arith.constant 0 : index
    %c0_171 = arith.constant 0 : index
    %228 = vector.load %arg4[%c5_169, %c0_170, %c0_171] : memref<9x16x256xf32, #tpu.memory_space<vmem>>, vector<1x8x256xf32>
    %229 = vector.shape_cast %228 : vector<1x8x256xf32> to vector<8x256xf32>
    %230 = arith.mulf %227, %229 : vector<8x256xf32>
    %c241_i32_172 = arith.constant 241 : i32
    %231 = tpu.dynamic_rotate %210 by %c241_i32_172 dim 1 : vector<8x256xf32>, i32 -> vector<8x256xf32>
    %c6_173 = arith.constant 6 : index
    %c0_174 = arith.constant 0 : index
    %c0_175 = arith.constant 0 : index
    %232 = vector.load %arg4[%c6_173, %c0_174, %c0_175] : memref<9x16x256xf32, #tpu.memory_space<vmem>>, vector<1x8x256xf32>
    %233 = vector.shape_cast %232 : vector<1x8x256xf32> to vector<8x256xf32>
    %234 = arith.mulf %231, %233 : vector<8x256xf32>
    %c240_i32_176 = arith.constant 240 : i32
    %235 = tpu.dynamic_rotate %210 by %c240_i32_176 dim 1 : vector<8x256xf32>, i32 -> vector<8x256xf32>
    %c7_177 = arith.constant 7 : index
    %c0_178 = arith.constant 0 : index
    %c0_179 = arith.constant 0 : index
    %236 = vector.load %arg4[%c7_177, %c0_178, %c0_179] : memref<9x16x256xf32, #tpu.memory_space<vmem>>, vector<1x8x256xf32>
    %237 = vector.shape_cast %236 : vector<1x8x256xf32> to vector<8x256xf32>
    %238 = arith.mulf %235, %237 : vector<8x256xf32>
    %c239_i32_180 = arith.constant 239 : i32
    %239 = tpu.dynamic_rotate %210 by %c239_i32_180 dim 1 : vector<8x256xf32>, i32 -> vector<8x256xf32>
    %c8_181 = arith.constant 8 : index
    %c0_182 = arith.constant 0 : index
    %c0_183 = arith.constant 0 : index
    %240 = vector.load %arg4[%c8_181, %c0_182, %c0_183] : memref<9x16x256xf32, #tpu.memory_space<vmem>>, vector<1x8x256xf32>
    %241 = vector.shape_cast %240 : vector<1x8x256xf32> to vector<8x256xf32>
    %242 = arith.mulf %239, %241 : vector<8x256xf32>
    %243 = tpu.concatenate %214, %218, %222, %226, %210, %230, %234, %238, %242 in 0 : vector<8x256xf32>, vector<8x256xf32>, vector<8x256xf32>, vector<8x256xf32>, vector<8x256xf32>, vector<8x256xf32>, vector<8x256xf32>, vector<8x256xf32>, vector<8x256xf32> -> vector<72x256xf32>
    %c32 = arith.constant 32 : index
    %c0_184 = arith.constant 0 : index
    %244 = vector.load %arg5[%c32, %c0_184] : memref<40x144xf32, #tpu.memory_space<vmem>>, vector<8x72xf32>
    %cst_185 = arith.constant dense<0.000000e+00> : vector<8x256xf32>
    %245 = tpu.matmul %244, %243, %cst_185 {dimension_numbers = #tpu.dot_dimension_numbers<[1], [0], [0], [1], [0, 0, 1, 1], [], []>} : vector<8x72xf32>, vector<72x256xf32>, vector<8x256xf32> -> vector<8x256xf32>
    %c24_186 = arith.constant 24 : index
    %c0_187 = arith.constant 0 : index
    %246 = vector.load %arg6[%c24_186, %c0_187] : memref<32x1xf32, #tpu.memory_space<vmem>>, vector<8x1xf32>
    %247 = vector.broadcast %246 : vector<8x1xf32> to vector<8x256xf32>
    %248 = arith.addf %245, %247 : vector<8x256xf32>
    %249 = arith.addf %248, %210 : vector<8x256xf32>
    %cst_188 = arith.constant 5.000000e-01 : f32
    %250 = vector.broadcast %cst_188 : f32 to vector<8x256xf32>
    %251 = arith.mulf %250, %249 : vector<8x256xf32>
    %252 = arith.mulf %249, %249 : vector<8x256xf32>
    %253 = arith.mulf %252, %249 : vector<8x256xf32>
    %cst_189 = arith.constant 4.471500e-02 : f32
    %254 = vector.broadcast %cst_189 : f32 to vector<8x256xf32>
    %255 = arith.mulf %254, %253 : vector<8x256xf32>
    %256 = arith.addf %249, %255 : vector<8x256xf32>
    %cst_190 = arith.constant 0.797884583 : f32
    %257 = vector.broadcast %cst_190 : f32 to vector<8x256xf32>
    %258 = arith.mulf %257, %256 : vector<8x256xf32>
    %259 = math.tanh %258 : vector<8x256xf32>
    %cst_191 = arith.constant 1.000000e+00 : f32
    %260 = vector.broadcast %cst_191 : f32 to vector<8x256xf32>
    %261 = arith.addf %260, %259 : vector<8x256xf32>
    %262 = arith.mulf %251, %261 : vector<8x256xf32>
    %c0_192 = arith.constant 0 : index
    %c0_193 = arith.constant 0 : index
    %c0_194 = arith.constant 0 : index
    %263 = vector.load %arg7[%c0_192, %c0_193, %c0_194] : memref<1x8x256xf32, #tpu.memory_space<vmem>>, vector<1x8x256xf32>
    %264 = vector.shape_cast %263 : vector<1x8x256xf32> to vector<8x256xf32>
    %265 = vector.shape_cast %262 : vector<8x256xf32> to vector<1x8x256xf32>
    tpu.vector_store %arg7[%c0_192, %c0_193, %c0_194], %265 {strides = array<i32>} : memref<1x8x256xf32, #tpu.memory_space<vmem>>, vector<1x8x256xf32>,
    return
  }
  func.func @transform_0(%arg0: i32) -> (i32, i32, i32) {
    %c0_i32 = arith.constant 0 : i32
    %c0_i32_0 = arith.constant 0 : i32
    %c0_i32_1 = arith.constant 0 : i32
    return %arg0, %c0_i32, %c0_i32_0 : i32, i32, i32
  }
  func.func @transform_1(%arg0: i32) -> (i32, i32, i32) {
    %c0_i32 = arith.constant 0 : i32
    %c0_i32_0 = arith.constant 0 : i32
    %c0_i32_1 = arith.constant 0 : i32
    return %arg0, %c0_i32, %c0_i32_0 : i32, i32, i32
  }
  func.func @transform_2(%arg0: i32) -> (i32, i32) {
    %c0_i32 = arith.constant 0 : i32
    %c0_i32_0 = arith.constant 0 : i32
    %c0_i32_1 = arith.constant 0 : i32
    return %c0_i32, %c0_i32_0 : i32, i32
  }
  func.func @transform_3(%arg0: i32) -> (i32, i32, i32) {
    %c0_i32 = arith.constant 0 : i32
    %c0_i32_0 = arith.constant 0 : i32
    %c0_i32_1 = arith.constant 0 : i32
    %c0_i32_2 = arith.constant 0 : i32
    return %c0_i32, %c0_i32_0, %c0_i32_1 : i32, i32, i32
  }
  func.func @transform_4(%arg0: i32) -> (i32, i32) {
    %c0_i32 = arith.constant 0 : i32
    %c0_i32_0 = arith.constant 0 : i32
    %c0_i32_1 = arith.constant 0 : i32
    return %c0_i32, %c0_i32_0 : i32, i32
  }
  func.func @transform_5(%arg0: i32) -> (i32, i32) {
    %c0_i32 = arith.constant 0 : i32
    %c0_i32_0 = arith.constant 0 : i32
    %c0_i32_1 = arith.constant 0 : i32
    return %c0_i32, %c0_i32_0 : i32, i32
  }
  func.func @transform_6(%arg0: i32) -> (i32, i32, i32) {
    %c0_i32 = arith.constant 0 : i32
    %c0_i32_0 = arith.constant 0 : i32
    %c0_i32_1 = arith.constant 0 : i32
    return %arg0, %c0_i32, %c0_i32_0 : i32, i32, i32
  }
}

</mosaic_0001>

<llo_original>
// kernel: upsample_forward.1
$region0: #{upsample_forward.1}
  #allocation0 [shape = 'u32[]', space=smem, size = 0x4, offset = 0x4, fixed_abs, tag = 'smem constant byte address 0x4 - core index']
  #allocation1 [shape = 'u32[144,128]{1,0:T(1,128)}', space=vmem, size = 0x12000, scoped, tag = 'internal scratch']
  %s0 = inlined_call_operand.vmem [shape: f32[2,8,64], index: 0, kind: input, shape index: {}]
  %s1 = inlined_call_operand.vmem [shape: f32[2,8,256], index: 1, kind: input, shape index: {}]
  %s2 = inlined_call_operand.vmem [shape: f32[64,256], index: 2, kind: input, shape index: {}]
  %s3 = inlined_call_operand.vmem [shape: f32[9,16,256], index: 3, kind: input, shape index: {}]
  %s4 = inlined_call_operand.vmem [shape: f32[40,144], index: 4, kind: input, shape index: {}]
  %s5 = inlined_call_operand.vmem [shape: f32[32,1], index: 5, kind: input, shape index: {}]
  %s6 = inlined_call_operand.vmem [shape: f32[2,8,256], index: 6, kind: output, shape index: {}]
  %s7 = sld [smem:[#allocation0]]
  $region57: #{upsample_forward.1} parent=0
    _
  %s9 = ssub.s32 1, %s7
  %s10 = scalar_select 0, %s9, %s7
  loop: start=0, step=1, limit=4
  $region2: #{upsample_forward.1} parent=0 // loop_pre_header
    _
  $region3: #{upsample_forward.1} parent=0 // loop_header
    %s12 = sphi 0, %s16
    %p13 = scmp.ge.s32.totalorder %s12, 4
    %s22 = sphi 0, %s24
    %s25 = sphi 0, %s22
    %s26 = sphi 0, %s25
    %s42 = sphi 0, %s26
    %s48 = sphi 0, %s50
    %s51 = sphi 0, %s48
    %s52 = sphi 0, %s51
    %s68 = sphi 0, %s52
    %s72 = sphi 0, %s72
    %s74 = sphi 0, %s72
    %s75 = sphi 0, %s74
    %s89 = sphi 0, %s75
    %s93 = sphi 0, %s93
    %s95 = sphi 0, %s93
    %s96 = sphi 0, %s95
    %s110 = sphi 0, %s96
    %s114 = sphi 0, %s114
    %s116 = sphi 0, %s114
    %s117 = sphi 0, %s116
    %s131 = sphi 0, %s117
    %s135 = sphi 0, %s135
    %s137 = sphi 0, %s135
    %s138 = sphi 0, %s137
    %s152 = sphi 0, %s138
    %s158 = sphi 0, %s160
    %s161 = sphi 0, %s158
    %s162 = sphi 0, %s161
    %s178 = sphi 0, %s162
  $region4: #{upsample_forward.1} parent=0 // loop_header_branch
    %15 = sbr.rel (%p13) target = $region8
  $region5: #{upsample_forward.1} parent=0 // loop_body
    %s17 = ssub.s32 %s12, 1
    %s18 = ssub.s32 %s12, 2
    %s19 = sadd.s32 %s12, 1
    %s20 = ssub.s32 %s12, %s19
    %p21 = scmp.eq.s32.totalorder %s20, 0
    %s23 = sadd.s32 %s22, 1
    %s24 = scalar_select %p21, %s22, %s23
    %p27 = pneg %p21
    %p28 = scmp.eq.s32.totalorder %s12, 1
    %p29 = por %p27, %p28
    %p30 = scmp.ne.s32.totalorder %s22, %s25
    %p31 = scmp.eq.s32.totalorder %s12, 0
    %p32 = por %p30, %p31
    %p33 = scmp.ne.s32.totalorder %s22, %s25
    %p34 = scmp.eq.s32.totalorder %s17, 1
    %p35 = por %p33, %p34
    %p36 = scmp.ne.s32.totalorder %s25, %s26
    %p37 = scmp.eq.s32.totalorder %s17, 0
    %p38 = por %p36, %p37
    %p39 = scmp.ne.s32.totalorder %s25, %s26
    %p40 = scmp.eq.s32.totalorder %s18, 1
    %p41 = por %p39, %p40
    %p43 = scmp.ne.s32.totalorder %s26, %s42
    %p44 = scmp.eq.s32.totalorder %s18, 0
    %p45 = por %p43, %p44
    %s46 = ssub.s32 %s12, %s19
    %p47 = scmp.eq.s32.totalorder %s46, 0
    %s49 = sadd.s32 %s48, 1
    %s50 = scalar_select %p47, %s48, %s49
    %p53 = pneg %p47
    %p54 = scmp.eq.s32.totalorder %s12, 1
    %p55 = por %p53, %p54
    %p56 = scmp.ne.s32.totalorder %s48, %s51
    %p57 = scmp.eq.s32.totalorder %s12, 0
    %p58 = por %p56, %p57
    %p59 = scmp.ne.s32.totalorder %s48, %s51
    %p60 = scmp.eq.s32.totalorder %s17, 1
    %p61 = por %p59, %p60
    %p62 = scmp.ne.s32.totalorder %s51, %s52
    %p63 = scmp.eq.s32.totalorder %s17, 0
    %p64 = por %p62, %p63
    %p65 = scmp.ne.s32.totalorder %s51, %s52
    %p66 = scmp.eq.s32.totalorder %s18, 1
    %p67 = por %p65, %p66
    %p69 = scmp.ne.s32.totalorder %s52, %s68
    %p70 = scmp.eq.s32.totalorder %s18, 0
    %p71 = por %p69, %p70
    %s73 = sadd.s32 %s72, 1
    %p76 = scmp.eq.s32.totalorder %s12, 1
    %p77 = scmp.ne.s32.totalorder %s72, %s74
    %p78 = scmp.eq.s32.totalorder %s12, 0
    %p79 = por %p77, %p78
    %p80 = scmp.ne.s32.totalorder %s72, %s74
    %p81 = scmp.eq.s32.totalorder %s17, 1
    %p82 = por %p80, %p81
    %p83 = scmp.ne.s32.totalorder %s74, %s75
    %p84 = scmp.eq.s32.totalorder %s17, 0
    %p85 = por %p83, %p84
    %p86 = scmp.ne.s32.totalorder %s74, %s75
    %p87 = scmp.eq.s32.totalorder %s18, 1
    %p88 = por %p86, %p87
    %p90 = scmp.ne.s32.totalorder %s75, %s89
    %p91 = scmp.eq.s32.totalorder %s18, 0
    %p92 = por %p90, %p91
    %s94 = sadd.s32 %s93, 1
    %p97 = scmp.eq.s32.totalorder %s12, 1
    %p98 = scmp.ne.s32.totalorder %s93, %s95
    %p99 = scmp.eq.s32.totalorder %s12, 0
    %p100 = por %p98, %p99
    %p101 = scmp.ne.s32.totalorder %s93, %s95
    %p102 = scmp.eq.s32.totalorder %s17, 1
    %p103 = por %p101, %p102
    %p104 = scmp.ne.s32.totalorder %s95, %s96
    %p105 = scmp.eq.s32.totalorder %s17, 0
    %p106 = por %p104, %p105
    %p107 = scmp.ne.s32.totalorder %s95, %s96
    %p108 = scmp.eq.s32.totalorder %s18, 1
    %p109 = por %p107, %p108
    %p111 = scmp.ne.s32.totalorder %s96, %s110
    %p112 = scmp.eq.s32.totalorder %s18, 0
    %p113 = por %p111, %p112
    %s115 = sadd.s32 %s114, 1
    %p118 = scmp.eq.s32.totalorder %s12, 1
    %p119 = scmp.ne.s32.totalorder %s114, %s116
    %p120 = scmp.eq.s32.totalorder %s12, 0
    %p121 = por %p119, %p120
    %p122 = scmp.ne.s32.totalorder %s114, %s116
    %p123 = scmp.eq.s32.totalorder %s17, 1
    %p124 = por %p122, %p123
    %p125 = scmp.ne.s32.totalorder %s116, %s117
    %p126 = scmp.eq.s32.totalorder %s17, 0
    %p127 = por %p125, %p126
    %p128 = scmp.ne.s32.totalorder %s116, %s117
    %p129 = scmp.eq.s32.totalorder %s18, 1
    %p130 = por %p128, %p129
    %p132 = scmp.ne.s32.totalorder %s117, %s131
    %p133 = scmp.eq.s32.totalorder %s18, 0
    %p134 = por %p132, %p133
    %s136 = sadd.s32 %s135, 1
    %p139 = scmp.eq.s32.totalorder %s12, 1
    %p140 = scmp.ne.s32.totalorder %s135, %s137
    %p141 = scmp.eq.s32.totalorder %s12, 0
    %p142 = por %p140, %p141
    %p143 = scmp.ne.s32.totalorder %s135, %s137
    %p144 = scmp.eq.s32.totalorder %s17, 1
    %p145 = por %p143, %p144
    %p146 = scmp.ne.s32.totalorder %s137, %s138
    %p147 = scmp.eq.s32.totalorder %s17, 0
    %p148 = por %p146, %p147
    %p149 = scmp.ne.s32.totalorder %s137, %s138
    %p150 = scmp.eq.s32.totalorder %s18, 1
    %p151 = por %p149, %p150
    %p153 = scmp.ne.s32.totalorder %s138, %s152
    %p154 = scmp.eq.s32.totalorder %s18, 0
    %p155 = por %p153, %p154
    %s156 = ssub.s32 %s12, %s19
    %p157 = scmp.eq.s32.totalorder %s156, 0
    %s159 = sadd.s32 %s158, 1
    %s160 = scalar_select %p157, %s158, %s159
    %p163 = pneg %p157
    %p164 = scmp.eq.s32.totalorder %s12, 1
    %p165 = por %p163, %p164
    %p166 = scmp.ne.s32.totalorder %s158, %s161
    %p167 = scmp.eq.s32.totalorder %s12, 0
    %p168 = por %p166, %p167
    %p169 = scmp.ne.s32.totalorder %s158, %s161
    %p170 = scmp.eq.s32.totalorder %s17, 1
    %p171 = por %p169, %p170
    %p172 = scmp.ne.s32.totalorder %s161, %s162
    %p173 = scmp.eq.s32.totalorder %s17, 0
    %p174 = por %p172, %p173
    %p175 = scmp.ne.s32.totalorder %s161, %s162
    %p176 = scmp.eq.s32.totalorder %s18, 1
    %p177 = por %p175, %p176
    %p179 = scmp.ne.s32.totalorder %s162, %s178
    %p180 = scmp.eq.s32.totalorder %s18, 0
    %p181 = por %p179, %p180
    %p182 = scmp.le.s32.totalorder 1, %s12
    %p183 = scmp.lt.s32.totalorder %s12, 3
    %p184 = pnand %p182, %p183
    %p185 = pneg %p184
    // Predicated region
    $region9: #{upsample_forward.1} parent=5 // pred_check
      _
    $region10: #{upsample_forward.1} parent=5 // pred_check_branch
      %187 = sbr.rel (%p184) target = $region12
    $region11: #{upsample_forward.1} parent=5 // pred_region
      %s188 = ssub.s32 %s12, 1
      // Predicated region
      $region13: #{upsample_forward.1} parent=11 // pred_check
        %p189 = pneg %p85
      $region14: #{upsample_forward.1} parent=11 // pred_check_branch
        %191 = sbr.rel (%p189) target = $region16
      $region15: #{upsample_forward.1} parent=11 // pred_region
        _
      $region16: #{upsample_forward.1} parent=11 // pred_fallthru
        _
      // Predicated region
      $region17: #{upsample_forward.1} parent=11 // pred_check
        %p192 = pneg %p106
      $region18: #{upsample_forward.1} parent=11 // pred_check_branch
        %194 = sbr.rel (%p192) target = $region20
      $region19: #{upsample_forward.1} parent=11 // pred_region
        _
      $region20: #{upsample_forward.1} parent=11 // pred_fallthru
        _
      // Predicated region
      $region21: #{upsample_forward.1} parent=11 // pred_check
        %p195 = pneg %p127
      $region22: #{upsample_forward.1} parent=11 // pred_check_branch
        %197 = sbr.rel (%p195) target = $region24
      $region23: #{upsample_forward.1} parent=11 // pred_region
        _
      $region24: #{upsample_forward.1} parent=11 // pred_fallthru
        _
      // Predicated region
      $region25: #{upsample_forward.1} parent=11 // pred_check
        %p198 = pneg %p148
      $region26: #{upsample_forward.1} parent=11 // pred_check_branch
        %200 = sbr.rel (%p198) target = $region28
      $region27: #{upsample_forward.1} parent=11 // pred_region
        _
      $region28: #{upsample_forward.1} parent=11 // pred_fallthru
        _
    $region12: #{upsample_forward.1} parent=5 // pred_fallthru
      _
    %p201 = scmp.lt.s32.totalorder %s12, 2
    // Predicated region
    $region29: #{upsample_forward.1} parent=5 // pred_check
      %p202 = pneg %p201
    $region30: #{upsample_forward.1} parent=5 // pred_check_branch
      %204 = sbr.rel (%p202) target = $region32
    $region31: #{upsample_forward.1} parent=5 // pred_region
      // Predicated region
      $region33: #{upsample_forward.1} parent=31 // pred_check
        %p205 = pneg %p32
      $region34: #{upsample_forward.1} parent=31 // pred_check_branch
        %207 = sbr.rel (%p205) target = $region36
      $region35: #{upsample_forward.1} parent=31 // pred_region
        %p208 = scmp.lt.s32.totalorder %s12, 1
        %s209 = scalar_select %p208, %s12, 1
        %s210 = smul.addr %s209, 8
        %s211 = scalar_lea.vmem %s0, %s210
      $region36: #{upsample_forward.1} parent=31 // pred_fallthru
        _
      // Predicated region
      $region37: #{upsample_forward.1} parent=31 // pred_check
        %p212 = pneg %p58
      $region38: #{upsample_forward.1} parent=31 // pred_check_branch
        %214 = sbr.rel (%p212) target = $region40
      $region39: #{upsample_forward.1} parent=31 // pred_region
        %p215 = scmp.lt.s32.totalorder %s12, 1
        %s216 = scalar_select %p215, %s12, 1
        %s217 = smul.addr %s216, 2
        %s218 = smul.addr %s217, 8
        %s219 = scalar_lea.vmem %s1, %s218
      $region40: #{upsample_forward.1} parent=31 // pred_fallthru
        _
    $region32: #{upsample_forward.1} parent=5 // pred_fallthru
      _
    %p220 = scmp.le.s32.totalorder 1, %s12
    %p221 = scmp.lt.s32.totalorder %s12, 3
    %p222 = pnand %p220, %p221
    %p223 = pneg %p222
    // Predicated region
    $region41: #{upsample_forward.1} parent=5 // pred_check
      _
    $region42: #{upsample_forward.1} parent=5 // pred_check_branch
      %225 = sbr.rel (%p222) target = $region44
    $region43: #{upsample_forward.1} parent=5 // pred_region
      %s226 = ssub.s32 %s12, 1
      %p227 = scmp.lt.s32.totalorder %s17, 1
      %s228 = scalar_select %p227, %s17, 1
      %s229 = smul.addr %s228, 8
      %s230 = scalar_lea.vmem %s0, %s229
      %p231 = pneg %p38
      %p232 = pneg %p35
      %p233 = scmp.lt.s32.totalorder %s17, 1
      %s234 = scalar_select %p233, %s17, 1
      %s235 = smul.addr %s234, 2
      %s236 = smul.addr %s235, 8
      %s237 = scalar_lea.vmem %s1, %s236
      %p238 = pneg %p64
      %p239 = pneg %p61
      %p240 = pneg %p85
      %p241 = pneg %p82
      %p242 = pneg %p106
      %p243 = pneg %p103
      %p244 = pneg %p127
      %p245 = pneg %p124
      %p246 = pneg %p148
      %p247 = pneg %p145
      %p248 = pneg %p174
      %p249 = pneg %p171
      %p250 = scmp.lt.s32.totalorder %s17, 1
      %s251 = scalar_select %p250, %s17, 1
      %s252 = smul.addr %s251, 2
      %s253 = smul.addr %s252, 8
      %s254 = scalar_lea.vmem %s6, %s253
      %p255 = scmp.lt.s32.totalorder %s17, 1
      %s256 = scalar_select %p255, %s17, 1
      %s257 = smul.addr %s256, 8
      %s258 = scalar_lea.vmem %s0, %s257
      %p259 = scmp.lt.s32.totalorder %s17, 1
      %s260 = scalar_select %p259, %s17, 1
      %s261 = smul.addr %s260, 2
      %s262 = smul.addr %s261, 8
      %s263 = scalar_lea.vmem %s1, %s262
      %p264 = scmp.lt.s32.totalorder %s17, 1
      %s265 = scalar_select %p264, %s17, 1
      %s266 = smul.addr %s265, 2
      %s267 = smul.addr %s266, 8
      %s268 = scalar_lea.vmem %s6, %s267
      %v269 = vld [vmem:[%s263] sm:$0xff]
      %v270 = vld [vmem:[%s263 + $0x8] sm:$0xff]
      %v271 = vld [vmem:[%s258] sm:$0xff]
      %272 = vrot.lane.b32.xlu0 %v269, 17
      %v273 = vpop.permute.xlu0 %272
      %274 = vrot.lane.b32.xlu0 %v270, 17
      %v275 = vpop.permute.xlu0 %274
      %v276 = vlaneseq
      %v277 = vand.u32 %v276, 127
      %vm278 = vcmp.lt.s32.totalorder %v277, 17
      %v279 = vsel %vm278, %v273, %v275
      %v280 = vsel %vm278, %v275, %v273
      %v281 = vld [vmem:[%s3] sm:$0xff]
      %v282 = vld [vmem:[%s3 + $0x8] sm:$0xff]
      %v283 = vmul.f32 %v280, %v281
      %v284 = vmul.f32 %v279, %v282
      %285 = vrot.lane.b32.xlu0 %v269, 16
      %v286 = vpop.permute.xlu0 %285
      %287 = vrot.lane.b32.xlu0 %v270, 16
      %v288 = vpop.permute.xlu0 %287
      %vm289 = vcmp.lt.s32.totalorder %v277, 16
      %v290 = vsel %vm289, %v286, %v288
      %v291 = vsel %vm289, %v288, %v286
      %s292 = scalar_lea.vmem %s3, 32
      %v293 = vld [vmem:[%s292] sm:$0xff]
      %v294 = vld [vmem:[%s292 + $0x8] sm:$0xff]
      %v295 = vmul.f32 %v291, %v293
      %v296 = vmul.f32 %v290, %v294
      %297 = vrot.lane.b32.xlu0 %v269, 15
      %v298 = vpop.permute.xlu0 %297
      %299 = vrot.lane.b32.xlu0 %v270, 15
      %v300 = vpop.permute.xlu0 %299
      %vm301 = vcmp.lt.s32.totalorder %v277, 15
      %v302 = vsel %vm301, %v298, %v300
      %v303 = vsel %vm301, %v300, %v298
      %s304 = scalar_lea.vmem %s3, 64
      %v305 = vld [vmem:[%s304] sm:$0xff]
      %v306 = vld [vmem:[%s304 + $0x8] sm:$0xff]
      %v307 = vmul.f32 %v303, %v305
      %v308 = vmul.f32 %v302, %v306
      %309 = vrot.lane.b32.xlu0 %v269, 1
      %v310 = vpop.permute.xlu0 %309
      %311 = vrot.lane.b32.xlu0 %v270, 1
      %v312 = vpop.permute.xlu0 %311
      %vm313 = vcmp.lt.s32.totalorder %v277, 1
      %v314 = vsel %vm313, %v310, %v312
      %v315 = vsel %vm313, %v312, %v310
      %s316 = scalar_lea.vmem %s3, 96
      %v317 = vld [vmem:[%s316] sm:$0xff]
      %v318 = vld [vmem:[%s316 + $0x8] sm:$0xff]
      %v319 = vmul.f32 %v315, %v317
      %v320 = vmul.f32 %v314, %v318
      %321 = vrot.lane.b32.xlu0 %v269, 127
      %v322 = vpop.permute.xlu0 %321
      %323 = vrot.lane.b32.xlu0 %v270, 127
      %v324 = vpop.permute.xlu0 %323
      %vm325 = vcmp.lt.s32.totalorder %v277, 127
      %v326 = vsel %vm325, %v322, %v324
      %v327 = vsel %vm325, %v324, %v322
      %s328 = scalar_lea.vmem %s3, 160
      %v329 = vld [vmem:[%s328] sm:$0xff]
      %v330 = vld [vmem:[%s328 + $0x8] sm:$0xff]
      %v331 = vmul.f32 %v326, %v329
      %v332 = vmul.f32 %v327, %v330
      %333 = vrot.lane.b32.xlu0 %v269, 113
      %v334 = vpop.permute.xlu0 %333
      %335 = vrot.lane.b32.xlu0 %v270, 113
      %v336 = vpop.permute.xlu0 %335
      %vm337 = vcmp.lt.s32.totalorder %v277, 113
      %v338 = vsel %vm337, %v334, %v336
      %v339 = vsel %vm337, %v336, %v334
      %s340 = scalar_lea.vmem %s3, 192
      %v341 = vld [vmem:[%s340] sm:$0xff]
      %v342 = vld [vmem:[%s340 + $0x8] sm:$0xff]
      %v343 = vmul.f32 %v338, %v341
      %v344 = vmul.f32 %v339, %v342
      %345 = vrot.lane.b32.xlu0 %v269, 112
      %v346 = vpop.permute.xlu0 %345
      %347 = vrot.lane.b32.xlu0 %v270, 112
      %v348 = vpop.permute.xlu0 %347
      %vm349 = vcmp.lt.s32.totalorder %v277, 112
      %v350 = vsel %vm349, %v346, %v348
      %v351 = vsel %vm349, %v348, %v346
      %s352 = scalar_lea.vmem %s3, 224
      %v353 = vld [vmem:[%s352] sm:$0xff]
      %v354 = vld [vmem:[%s352 + $0x8] sm:$0xff]
      %v355 = vmul.f32 %v350, %v353
      %v356 = vmul.f32 %v351, %v354
      %357 = vrot.lane.b32.xlu0 %v269, 111
      %v358 = vpop.permute.xlu0 %357
      %359 = vrot.lane.b32.xlu0 %v270, 111
      %v360 = vpop.permute.xlu0 %359
      %vm361 = vcmp.lt.s32.totalorder %v277, 111
      %v362 = vsel %vm361, %v358, %v360
      %v363 = vsel %vm361, %v360, %v358
      %s364 = scalar_lea.vmem %s3, 256
      %v365 = vld [vmem:[%s364] sm:$0xff]
      %v366 = vld [vmem:[%s364 + $0x8] sm:$0xff]
      %v367 = vmul.f32 %v362, %v365
      %v368 = vmul.f32 %v363, %v366
      %v369 = vld [vmem:[%s4] sm:$0xff]
      %v370 = vld [vmem:[%s5] sm:$0xff]
      %372 = vset.pattern.permute.xlu0 0
      %373 = vperm.xlu0 %372, %v370
      %v374 = vpop.permute.xlu0 %373
      %vm376 = vcmask 588800
      %v378 = vsel %vm376, %v369, 0
      %380 = vmatprep.subr.mxu0 %v284
      %381 = vmatpush1.msra.mxu0 %v283
      %382 = vmatprep.subr.mxu0 %v296
      %383 = vmatpush1.msra.mxu0 %v295
      %384 = vmatprep.subr.mxu0 %v308
      %385 = vmatpush1.msra.mxu0 %v307
      %386 = vmatprep.subr.mxu0 %v320
      %387 = vmatpush1.msra.mxu0 %v319
      %388 = vmatprep.subr.mxu0 %v270
      %389 = vmatpush1.msra.mxu0 %v269
      %390 = vmatprep.subr.mxu0 %v332
      %391 = vmatpush1.msra.mxu0 %v331
      %392 = vmatprep.subr.mxu0 %v344
      %393 = vmatpush1.msra.mxu0 %v343
      %394 = vmatprep.subr.mxu0 %v356
      %395 = vmatpush1.msra.mxu0 %v355
      %396 = vmatprep.subr.mxu0 %v368
      %397 = vmatpush1.msra.mxu0 %v367
      %398 = vmatprep.subr.mxu0 0.0
      %399 = vmatpush1.msra.mxu0 0.0
      %400 = vmatprep.subr.mxu0 0.0
      %401 = vmatpush1.msra.mxu0 0.0
      %402 = vmatprep.subr.mxu0 0.0
      %403 = vmatpush1.msra.mxu0 0.0
      %404 = vmatprep.subr.mxu0 0.0
      %405 = vmatpush1.msra.mxu0 0.0
      %406 = vmatprep.subr.mxu0 0.0
      %407 = vmatpush1.msra.mxu0 0.0
      %408 = vmatprep.subr.mxu0 0.0
      %409 = vmatpush1.msra.mxu0 0.0
      %410 = vmatprep.subr.mxu0 0.0
      %411 = vmatpush1.msra.mxu0 0.0
      %412 = vmatprep.subr.mxu0 0.0
      %413 = vmatpush1.msra.mxu0 0.0
      %414 = vmatprep.subr.mxu0 0.0
      %415 = vmatpush1.msra.mxu0 0.0
      %416 = vmatprep.subr.mxu0 0.0
      %417 = vmatpush1.msra.mxu0 0.0
      %418 = vmatprep.subr.mxu0 0.0
      %419 = vmatpush1.msra.mxu0 0.0
      %420 = vmatprep.subr.mxu0 0.0
      %421 = vmatpush1.msra.mxu0 0.0
      %422 = vmatprep.subr.mxu0 0.0
      %423 = vmatpush1.msra.mxu0 0.0
      %424 = vmatprep.subr.mxu0 0.0
      %425 = vmatpush1.msra.mxu0 0.0
      %426 = vmatprep.subr.mxu0 0.0
      %427 = vmatpush1.msra.mxu0 0.0
      %428 = vmatprep.subr.mxu0 0.0
      %429 = vmatpush1.msra.mxu0 0.0
      %430 = vmatprep.subr.mxu0 0.0
      %431 = vmatpush1.msra.mxu0 0.0
      %432 = vmatprep.subr.mxu0 0.0
      %433 = vmatpush1.msra.mxu0 0.0
      %434 = vmatprep.subr.mxu0 0.0
      %435 = vmatpush1.msra.mxu0 0.0
      %436 = vmatprep.subr.mxu0 0.0
      %437 = vmatpush1.msra.mxu0 0.0
      %438 = vmatprep.subr.mxu0 0.0
      %439 = vmatpush1.msra.mxu0 0.0
      %440 = vmatprep.subr.mxu0 0.0
      %441 = vmatpush1.msra.mxu0 0.0
      %442 = vmatprep.subr.mxu0 0.0
      %443 = vmatpush1.msra.mxu0 0.0
      %444 = vmatprep.mubr.f32.mxu0 0.0
      %445 = vmatmul.mubr.f32.gmra.mrb[0].mxu0 %v378
      %v446 = vpop.f32.mrb[0].mxu0
      %v447 = vadd.f32 %v374, %v446
      %v448 = vpop.f32.mrb[0].mxu0
      %v449 = vadd.f32 %v374, %v448
      %450 = vdwg.mxu0
      %v451 = vadd.f32 %v447, %v269
      %v452 = vadd.f32 %v449, %v270
      %v453 = vmul.f32 %v451, 0.5
      %v454 = vmul.f32 %v452, 0.5
      %v455 = vmul.f32 %v451, %v451
      %v456 = vmul.f32 %v452, %v452
      %v457 = vmul.f32 %v455, %v451
      %v458 = vmul.f32 %v456, %v452
      %v459 = vmul.f32 %v457, 0.044715
      %v460 = vmul.f32 %v458, 0.044715
      %v461 = vadd.f32 %v451, %v459
      %v462 = vadd.f32 %v452, %v460
      %v463 = vmul.f32 %v461, 0.7978846
      %v464 = vmul.f32 %v462, 0.7978846
      %v465 = vtanh.pop %v463
      %v466 = vtanh.pop %v464
      %v467 = vadd.f32 %v465, 1.0
      %v468 = vadd.f32 %v466, 1.0
      %v469 = vmul.f32 %v453, %v467
      %v470 = vmul.f32 %v454, %v468
      %471 = vrot.lane.b32.xlu0 %v469, 17
      %v472 = vpop.permute.xlu0 %471
      %473 = vrot.lane.b32.xlu0 %v470, 17
      %v474 = vpop.permute.xlu0 %473
      %v475 = vsel %vm278, %v472, %v474
      %v476 = vsel %vm278, %v474, %v472
      %v477 = vmul.f32 %v476, %v281
      %v478 = vmul.f32 %v475, %v282
      %479 = vrot.lane.b32.xlu0 %v469, 16
      %v480 = vpop.permute.xlu0 %479
      %481 = vrot.lane.b32.xlu0 %v470, 16
      %v482 = vpop.permute.xlu0 %481
      %v483 = vsel %vm289, %v480, %v482
      %v484 = vsel %vm289, %v482, %v480
      %v485 = vmul.f32 %v484, %v293
      %v486 = vmul.f32 %v483, %v294
      %487 = vrot.lane.b32.xlu0 %v469, 15
      %v488 = vpop.permute.xlu0 %487
      %489 = vrot.lane.b32.xlu0 %v470, 15
      %v490 = vpop.permute.xlu0 %489
      %v491 = vsel %vm301, %v488, %v490
      %v492 = vsel %vm301, %v490, %v488
      %v493 = vmul.f32 %v492, %v305
      %v494 = vmul.f32 %v491, %v306
      %495 = vrot.lane.b32.xlu0 %v469, 1
      %v496 = vpop.permute.xlu0 %495
      %497 = vrot.lane.b32.xlu0 %v470, 1
      %v498 = vpop.permute.xlu0 %497
      %v499 = vsel %vm313, %v496, %v498
      %v500 = vsel %vm313, %v498, %v496
      %v501 = vmul.f32 %v500, %v317
      %v502 = vmul.f32 %v499, %v318
      %503 = vrot.lane.b32.xlu0 %v469, 127
      %v504 = vpop.permute.xlu0 %503
      %505 = vrot.lane.b32.xlu0 %v470, 127
      %v506 = vpop.permute.xlu0 %505
      %v507 = vsel %vm325, %v504, %v506
      %v508 = vsel %vm325, %v506, %v504
      %v509 = vmul.f32 %v507, %v329
      %v510 = vmul.f32 %v508, %v330
      %511 = vrot.lane.b32.xlu0 %v469, 113
      %v512 = vpop.permute.xlu0 %511
      %513 = vrot.lane.b32.xlu0 %v470, 113
      %v514 = vpop.permute.xlu0 %513
      %v515 = vsel %vm337, %v512, %v514
      %v516 = vsel %vm337, %v514, %v512
      %v517 = vmul.f32 %v515, %v341
      %v518 = vmul.f32 %v516, %v342
      %519 = vrot.lane.b32.xlu0 %v469, 112
      %v520 = vpop.permute.xlu0 %519
      %521 = vrot.lane.b32.xlu0 %v470, 112
      %v522 = vpop.permute.xlu0 %521
      %v523 = vsel %vm349, %v520, %v522
      %v524 = vsel %vm349, %v522, %v520
      %v525 = vmul.f32 %v523, %v353
      %v526 = vmul.f32 %v524, %v354
      %527 = vrot.lane.b32.xlu0 %v469, 111
      %v528 = vpop.permute.xlu0 %527
      %529 = vrot.lane.b32.xlu0 %v470, 111
      %v530 = vpop.permute.xlu0 %529
      %v531 = vsel %vm361, %v528, %v530
      %v532 = vsel %vm361, %v530, %v528
      %v533 = vmul.f32 %v531, %v365
      %v534 = vmul.f32 %v532, %v366
      %v535 = vld [vmem:[%s4 + $0x10] sm:$0xff]
      %v536 = vld [vmem:[%s5 + $0x8] sm:$0xff]
      %538 = vset.pattern.permute.xlu0 0
      %539 = vperm.xlu0 %538, %v536
      %v540 = vpop.permute.xlu0 %539
      %v543 = vsel %vm376, %v535, 0
      %545 = vmatprep.subr.mxu0 %v478
      %546 = vmatpush1.msra.mxu0 %v477
      %547 = vmatprep.subr.mxu0 %v486
      %548 = vmatpush1.msra.mxu0 %v485
      %549 = vmatprep.subr.mxu0 %v494
      %550 = vmatpush1.msra.mxu0 %v493
      %551 = vmatprep.subr.mxu0 %v502
      %552 = vmatpush1.msra.mxu0 %v501
      %553 = vmatprep.subr.mxu0 %v470
      %554 = vmatpush1.msra.mxu0 %v469
      %555 = vmatprep.subr.mxu0 %v510
      %556 = vmatpush1.msra.mxu0 %v509
      %557 = vmatprep.subr.mxu0 %v518
      %558 = vmatpush1.msra.mxu0 %v517
      %559 = vmatprep.subr.mxu0 %v526
      %560 = vmatpush1.msra.mxu0 %v525
      %561 = vmatprep.subr.mxu0 %v534
      %562 = vmatpush1.msra.mxu0 %v533
      %563 = vmatprep.subr.mxu0 0.0
      %564 = vmatpush1.msra.mxu0 0.0
      %565 = vmatprep.subr.mxu0 0.0
      %566 = vmatpush1.msra.mxu0 0.0
      %567 = vmatprep.subr.mxu0 0.0
      %568 = vmatpush1.msra.mxu0 0.0
      %569 = vmatprep.subr.mxu0 0.0
      %570 = vmatpush1.msra.mxu0 0.0
      %571 = vmatprep.subr.mxu0 0.0
      %572 = vmatpush1.msra.mxu0 0.0
      %573 = vmatprep.subr.mxu0 0.0
      %574 = vmatpush1.msra.mxu0 0.0
      %575 = vmatprep.subr.mxu0 0.0
      %576 = vmatpush1.msra.mxu0 0.0
      %577 = vmatprep.subr.mxu0 0.0
      %578 = vmatpush1.msra.mxu0 0.0
      %579 = vmatprep.subr.mxu0 0.0
      %580 = vmatpush1.msra.mxu0 0.0
      %581 = vmatprep.subr.mxu0 0.0
      %582 = vmatpush1.msra.mxu0 0.0
      %583 = vmatprep.subr.mxu0 0.0
      %584 = vmatpush1.msra.mxu0 0.0
      %585 = vmatprep.subr.mxu0 0.0
      %586 = vmatpush1.msra.mxu0 0.0
      %587 = vmatprep.subr.mxu0 0.0
      %588 = vmatpush1.msra.mxu0 0.0
      %589 = vmatprep.subr.mxu0 0.0
      %590 = vmatpush1.msra.mxu0 0.0
      %591 = vmatprep.subr.mxu0 0.0
      %592 = vmatpush1.msra.mxu0 0.0
      %593 = vmatprep.subr.mxu0 0.0
      %594 = vmatpush1.msra.mxu0 0.0
      %595 = vmatprep.subr.mxu0 0.0
      %596 = vmatpush1.msra.mxu0 0.0
      %597 = vmatprep.subr.mxu0 0.0
      %598 = vmatpush1.msra.mxu0 0.0
      %599 = vmatprep.subr.mxu0 0.0
      %600 = vmatpush1.msra.mxu0 0.0
      %601 = vmatprep.subr.mxu0 0.0
      %602 = vmatpush1.msra.mxu0 0.0
      %603 = vmatprep.subr.mxu0 0.0
      %604 = vmatpush1.msra.mxu0 0.0
      %605 = vmatprep.subr.mxu0 0.0
      %606 = vmatpush1.msra.mxu0 0.0
      %607 = vmatprep.subr.mxu0 0.0
      %608 = vmatpush1.msra.mxu0 0.0
      %609 = vmatprep.mubr.f32.mxu0 0.0
      %610 = vmatmul.mubr.f32.gmra.mrb[0].mxu0 %v543
      %v611 = vpop.f32.mrb[0].mxu0
      %v612 = vadd.f32 %v540, %v611
      %v613 = vpop.f32.mrb[0].mxu0
      %v614 = vadd.f32 %v540, %v613
      %615 = vdwg.mxu0
      %v616 = vadd.f32 %v612, %v469
      %v617 = vadd.f32 %v614, %v470
      %v618 = vmul.f32 %v616, 0.5
      %v619 = vmul.f32 %v617, 0.5
      %v620 = vmul.f32 %v616, %v616
      %v621 = vmul.f32 %v617, %v617
      %v622 = vmul.f32 %v620, %v616
      %v623 = vmul.f32 %v621, %v617
      %v624 = vmul.f32 %v622, 0.044715
      %v625 = vmul.f32 %v623, 0.044715
      %v626 = vadd.f32 %v616, %v624
      %v627 = vadd.f32 %v617, %v625
      %v628 = vmul.f32 %v626, 0.7978846
      %v629 = vmul.f32 %v627, 0.7978846
      %v630 = vtanh.pop %v628
      %v631 = vtanh.pop %v629
      %v632 = vadd.f32 %v630, 1.0
      %v633 = vadd.f32 %v631, 1.0
      %v634 = vmul.f32 %v618, %v632
      %v635 = vmul.f32 %v619, %v633
      %v636 = vld [vmem:[%s2] sm:$0xff]
      %v637 = vld [vmem:[%s2 + $0x8] sm:$0xff]
      %v638 = vld [vmem:[%s2 + $0x10] sm:$0xff]
      %v639 = vld [vmem:[%s2 + $0x18] sm:$0xff]
      %v640 = vld [vmem:[%s2 + $0x20] sm:$0xff]
      %v641 = vld [vmem:[%s2 + $0x28] sm:$0xff]
      %v642 = vld [vmem:[%s2 + $0x30] sm:$0xff]
      %v643 = vld [vmem:[%s2 + $0x38] sm:$0xff]
      %v644 = vld [vmem:[%s2 + $0x40] sm:$0xff]
      %v645 = vld [vmem:[%s2 + $0x48] sm:$0xff]
      %v646 = vld [vmem:[%s2 + $0x50] sm:$0xff]
      %v647 = vld [vmem:[%s2 + $0x58] sm:$0xff]
      %v648 = vld [vmem:[%s2 + $0x60] sm:$0xff]
      %v649 = vld [vmem:[%s2 + $0x68] sm:$0xff]
      %v650 = vld [vmem:[%s2 + $0x70] sm:$0xff]
      %v651 = vld [vmem:[%s2 + $0x78] sm:$0xff]
      %vm652 = vcmask 523264
      %v654 = vsel %vm652, %v271, 0
      %656 = vmatprep.subr.mxu0 %v637
      %657 = vmatpush1.msra.mxu0 %v636
      %658 = vmatprep.subr.mxu0 %v639
      %659 = vmatpush1.msra.mxu0 %v638
      %660 = vmatprep.subr.mxu0 %v641
      %661 = vmatpush1.msra.mxu0 %v640
      %662 = vmatprep.subr.mxu0 %v643
      %663 = vmatpush1.msra.mxu0 %v642
      %664 = vmatprep.subr.mxu0 %v645
      %665 = vmatpush1.msra.mxu0 %v644
      %666 = vmatprep.subr.mxu0 %v647
      %667 = vmatpush1.msra.mxu0 %v646
      %668 = vmatprep.subr.mxu0 %v649
      %669 = vmatpush1.msra.mxu0 %v648
      %670 = vmatprep.subr.mxu0 %v651
      %671 = vmatpush1.msra.mxu0 %v650
      %672 = vmatprep.subr.mxu0 0.0
      %673 = vmatpush1.msra.mxu0 0.0
      %674 = vmatprep.subr.mxu0 0.0
      %675 = vmatpush1.msra.mxu0 0.0
      %676 = vmatprep.subr.mxu0 0.0
      %677 = vmatpush1.msra.mxu0 0.0
      %678 = vmatprep.subr.mxu0 0.0
      %679 = vmatpush1.msra.mxu0 0.0
      %680 = vmatprep.subr.mxu0 0.0
      %681 = vmatpush1.msra.mxu0 0.0
      %682 = vmatprep.subr.mxu0 0.0
      %683 = vmatpush1.msra.mxu0 0.0
      %684 = vmatprep.subr.mxu0 0.0
      %685 = vmatpush1.msra.mxu0 0.0
      %686 = vmatprep.subr.mxu0 0.0
      %687 = vmatpush1.msra.mxu0 0.0
      %688 = vmatprep.subr.mxu0 0.0
      %689 = vmatpush1.msra.mxu0 0.0
      %690 = vmatprep.subr.mxu0 0.0
      %691 = vmatpush1.msra.mxu0 0.0
      %692 = vmatprep.subr.mxu0 0.0
      %693 = vmatpush1.msra.mxu0 0.0
      %694 = vmatprep.subr.mxu0 0.0
      %695 = vmatpush1.msra.mxu0 0.0
      %696 = vmatprep.subr.mxu0 0.0
      %697 = vmatpush1.msra.mxu0 0.0
      %698 = vmatprep.subr.mxu0 0.0
      %699 = vmatpush1.msra.mxu0 0.0
      %700 = vmatprep.subr.mxu0 0.0
      %701 = vmatpush1.msra.mxu0 0.0
      %702 = vmatprep.subr.mxu0 0.0
      %703 = vmatpush1.msra.mxu0 0.0
      %704 = vmatprep.subr.mxu0 0.0
      %705 = vmatpush1.msra.mxu0 0.0
      %706 = vmatprep.subr.mxu0 0.0
      %707 = vmatpush1.msra.mxu0 0.0
      %708 = vmatprep.subr.mxu0 0.0
      %709 = vmatpush1.msra.mxu0 0.0
      %710 = vmatprep.subr.mxu0 0.0
      %711 = vmatpush1.msra.mxu0 0.0
      %712 = vmatprep.subr.mxu0 0.0
      %713 = vmatpush1.msra.mxu0 0.0
      %714 = vmatprep.subr.mxu0 0.0
      %715 = vmatpush1.msra.mxu0 0.0
      %716 = vmatprep.subr.mxu0 0.0
      %717 = vmatpush1.msra.mxu0 0.0
      %718 = vmatprep.subr.mxu0 0.0
      %719 = vmatpush1.msra.mxu0 0.0
      %720 = vmatprep.mubr.f32.mxu0 0.0
      %721 = vmatmul.mubr.f32.gmra.mrb[0].mxu0 %v654
      %v722 = vpop.f32.mrb[0].mxu0
      %v723 = vadd.f32 0.0, %v722
      %v724 = vpop.f32.mrb[0].mxu0
      %v725 = vadd.f32 0.0, %v724
      %726 = vdwg.mxu0
      %727 = vrot.lane.b32.xlu0 %v723, 17
      %v728 = vpop.permute.xlu0 %727
      %729 = vrot.lane.b32.xlu0 %v634, 17
      %v730 = vpop.permute.xlu0 %729
      %731 = vrot.lane.b32.xlu0 %v725, 17
      %v732 = vpop.permute.xlu0 %731
      %733 = vrot.lane.b32.xlu0 %v635, 17
      %v734 = vpop.permute.xlu0 %733
      %v735 = vsel %vm278, %v728, %v732
      %v736 = vsel %vm278, %v730, %v734
      %v737 = vsel %vm278, %v732, %v728
      %v738 = vsel %vm278, %v734, %v730
      %v739 = vld [vmem:[%s3] sm:$0xff]
      %v740 = vld [vmem:[%s3 + $0x8] sm:$0xff]
      %v741 = vld [vmem:[%s3 + $0x10] sm:$0xff]
      %v742 = vld [vmem:[%s3 + $0x18] sm:$0xff]
      %v743 = vmul.f32 %v737, %v739
      %v744 = vmul.f32 %v735, %v740
      %v745 = vmul.f32 %v738, %v741
      %v746 = vmul.f32 %v736, %v742
      %747 = vrot.lane.b32.xlu0 %v723, 16
      %v748 = vpop.permute.xlu0 %747
      %749 = vrot.lane.b32.xlu0 %v634, 16
      %v750 = vpop.permute.xlu0 %749
      %751 = vrot.lane.b32.xlu0 %v725, 16
      %v752 = vpop.permute.xlu0 %751
      %753 = vrot.lane.b32.xlu0 %v635, 16
      %v754 = vpop.permute.xlu0 %753
      %v755 = vsel %vm289, %v748, %v752
      %v756 = vsel %vm289, %v750, %v754
      %v757 = vsel %vm289, %v752, %v748
      %v758 = vsel %vm289, %v754, %v750
      %v759 = vld [vmem:[%s292] sm:$0xff]
      %v760 = vld [vmem:[%s292 + $0x8] sm:$0xff]
      %v761 = vld [vmem:[%s292 + $0x10] sm:$0xff]
      %v762 = vld [vmem:[%s292 + $0x18] sm:$0xff]
      %v763 = vmul.f32 %v757, %v759
      %v764 = vmul.f32 %v755, %v760
      %v765 = vmul.f32 %v758, %v761
      %v766 = vmul.f32 %v756, %v762
      %767 = vrot.lane.b32.xlu0 %v723, 15
      %v768 = vpop.permute.xlu0 %767
      %769 = vrot.lane.b32.xlu0 %v634, 15
      %v770 = vpop.permute.xlu0 %769
      %771 = vrot.lane.b32.xlu0 %v725, 15
      %v772 = vpop.permute.xlu0 %771
      %773 = vrot.lane.b32.xlu0 %v635, 15
      %v774 = vpop.permute.xlu0 %773
      %v775 = vsel %vm301, %v768, %v772
      %v776 = vsel %vm301, %v770, %v774
      %v777 = vsel %vm301, %v772, %v768
      %v778 = vsel %vm301, %v774, %v770
      %v779 = vld [vmem:[%s304] sm:$0xff]
      %v780 = vld [vmem:[%s304 + $0x8] sm:$0xff]
      %v781 = vld [vmem:[%s304 + $0x10] sm:$0xff]
      %v782 = vld [vmem:[%s304 + $0x18] sm:$0xff]
      %v783 = vmul.f32 %v777, %v779
      %v784 = vmul.f32 %v775, %v780
      %v785 = vmul.f32 %v778, %v781
      %v786 = vmul.f32 %v776, %v782
      %787 = vrot.lane.b32.xlu0 %v723, 1
      %v788 = vpop.permute.xlu0 %787
      %789 = vrot.lane.b32.xlu0 %v634, 1
      %v790 = vpop.permute.xlu0 %789
      %791 = vrot.lane.b32.xlu0 %v725, 1
      %v792 = vpop.permute.xlu0 %791
      %793 = vrot.lane.b32.xlu0 %v635, 1
      %v794 = vpop.permute.xlu0 %793
      %v795 = vsel %vm313, %v788, %v792
      %v796 = vsel %vm313, %v790, %v794
      %v797 = vsel %vm313, %v792, %v788
      %v798 = vsel %vm313, %v794, %v790
      %v799 = vld [vmem:[%s316] sm:$0xff]
      %v800 = vld [vmem:[%s316 + $0x8] sm:$0xff]
      %v801 = vld [vmem:[%s316 + $0x10] sm:$0xff]
      %v802 = vld [vmem:[%s316 + $0x18] sm:$0xff]
      %v803 = vmul.f32 %v797, %v799
      %v804 = vmul.f32 %v795, %v800
      %v805 = vmul.f32 %v798, %v801
      %v806 = vmul.f32 %v796, %v802
      %807 = vrot.lane.b32.xlu0 %v723, 127
      %v808 = vpop.permute.xlu0 %807
      %809 = vrot.lane.b32.xlu0 %v634, 127
      %v810 = vpop.permute.xlu0 %809
      %811 = vrot.lane.b32.xlu0 %v725, 127
      %v812 = vpop.permute.xlu0 %811
      %813 = vrot.lane.b32.xlu0 %v635, 127
      %v814 = vpop.permute.xlu0 %813
      %v815 = vsel %vm325, %v808, %v812
      %v816 = vsel %vm325, %v810, %v814
      %v817 = vsel %vm325, %v812, %v808
      %v818 = vsel %vm325, %v814, %v810
      %v819 = vld [vmem:[%s328] sm:$0xff]
      %v820 = vld [vmem:[%s328 + $0x8] sm:$0xff]
      %v821 = vld [vmem:[%s328 + $0x10] sm:$0xff]
      %v822 = vld [vmem:[%s328 + $0x18] sm:$0xff]
      %v823 = vmul.f32 %v815, %v819
      %v824 = vmul.f32 %v817, %v820
      %v825 = vmul.f32 %v816, %v821
      %v826 = vmul.f32 %v818, %v822
      %827 = vrot.lane.b32.xlu0 %v723, 113
      %v828 = vpop.permute.xlu0 %827
      %829 = vrot.lane.b32.xlu0 %v634, 113
      %v830 = vpop.permute.xlu0 %829
      %831 = vrot.lane.b32.xlu0 %v725, 113
      %v832 = vpop.permute.xlu0 %831
      %833 = vrot.lane.b32.xlu0 %v635, 113
      %v834 = vpop.permute.xlu0 %833
      %v835 = vsel %vm337, %v828, %v832
      %v836 = vsel %vm337, %v830, %v834
      %v837 = vsel %vm337, %v832, %v828
      %v838 = vsel %vm337, %v834, %v830
      %v839 = vld [vmem:[%s340] sm:$0xff]
      %v840 = vld [vmem:[%s340 + $0x8] sm:$0xff]
      %v841 = vld [vmem:[%s340 + $0x10] sm:$0xff]
      %v842 = vld [vmem:[%s340 + $0x18] sm:$0xff]
      %v843 = vmul.f32 %v835, %v839
      %v844 = vmul.f32 %v837, %v840
      %v845 = vmul.f32 %v836, %v841
      %v846 = vmul.f32 %v838, %v842
      %847 = vrot.lane.b32.xlu0 %v723, 112
      %v848 = vpop.permute.xlu0 %847
      %849 = vrot.lane.b32.xlu0 %v634, 112
      %v850 = vpop.permute.xlu0 %849
      %851 = vrot.lane.b32.xlu0 %v725, 112
      %v852 = vpop.permute.xlu0 %851
      %853 = vrot.lane.b32.xlu0 %v635, 112
      %v854 = vpop.permute.xlu0 %853
      %v855 = vsel %vm349, %v848, %v852
      %v856 = vsel %vm349, %v850, %v854
      %v857 = vsel %vm349, %v852, %v848
      %v858 = vsel %vm349, %v854, %v850
      %v859 = vld [vmem:[%s352] sm:$0xff]
      %v860 = vld [vmem:[%s352 + $0x8] sm:$0xff]
      %v861 = vld [vmem:[%s352 + $0x10] sm:$0xff]
      %v862 = vld [vmem:[%s352 + $0x18] sm:$0xff]
      %v863 = vmul.f32 %v855, %v859
      %v864 = vmul.f32 %v857, %v860
      %v865 = vmul.f32 %v856, %v861
      %v866 = vmul.f32 %v858, %v862
      %867 = vrot.lane.b32.xlu0 %v723, 111
      %v868 = vpop.permute.xlu0 %867
      %869 = vrot.lane.b32.xlu0 %v634, 111
      %v870 = vpop.permute.xlu0 %869
      %871 = vrot.lane.b32.xlu0 %v725, 111
      %v872 = vpop.permute.xlu0 %871
      %873 = vrot.lane.b32.xlu0 %v635, 111
      %v874 = vpop.permute.xlu0 %873
      %v875 = vsel %vm361, %v868, %v872
      %v876 = vsel %vm361, %v870, %v874
      %v877 = vsel %vm361, %v872, %v868
      %v878 = vsel %vm361, %v874, %v870
      %v879 = vld [vmem:[%s364] sm:$0xff]
      %v880 = vld [vmem:[%s364 + $0x8] sm:$0xff]
      %v881 = vld [vmem:[%s364 + $0x10] sm:$0xff]
      %v882 = vld [vmem:[%s364 + $0x18] sm:$0xff]
      %v883 = vmul.f32 %v875, %v879
      %v884 = vmul.f32 %v877, %v880
      %v885 = vmul.f32 %v876, %v881
      %v886 = vmul.f32 %v878, %v882
      %v887 = vld [vmem:[%s4 + $0x20] sm:$0xff]
      %v888 = vld [vmem:[%s4 + $0x28] sm:$0xff]
      %vm889 = vcmask 130048
      %v891 = vsel %vm889, %v888, 0
      %893 = vmatprep.subr.mxu0 %v744
      %894 = vmatpush1.msra.mxu0 %v743
      %895 = vmatprep.subr.mxu0 %v746
      %896 = vmatpush1.msra.mxu0 %v745
      %897 = vmatprep.subr.mxu0 %v764
      %898 = vmatpush1.msra.mxu0 %v763
      %899 = vmatprep.subr.mxu0 %v766
      %900 = vmatpush1.msra.mxu0 %v765
      %901 = vmatprep.subr.mxu0 %v784
      %902 = vmatpush1.msra.mxu0 %v783
      %903 = vmatprep.subr.mxu0 %v786
      %904 = vmatpush1.msra.mxu0 %v785
      %905 = vmatprep.subr.mxu0 %v804
      %906 = vmatpush1.msra.mxu0 %v803
      %907 = vmatprep.subr.mxu0 %v806
      %908 = vmatpush1.msra.mxu0 %v805
      %909 = vmatprep.subr.mxu0 %v725
      %910 = vmatpush1.msra.mxu0 %v723
      %911 = vmatprep.subr.mxu0 %v635
      %912 = vmatpush1.msra.mxu0 %v634
      %913 = vmatprep.subr.mxu0 %v824
      %914 = vmatpush1.msra.mxu0 %v823
      %915 = vmatprep.subr.mxu0 %v826
      %916 = vmatpush1.msra.mxu0 %v825
      %917 = vmatprep.subr.mxu0 %v844
      %918 = vmatpush1.msra.mxu0 %v843
      %919 = vmatprep.subr.mxu0 %v846
      %920 = vmatpush1.msra.mxu0 %v845
      %921 = vmatprep.subr.mxu0 %v864
      %922 = vmatpush1.msra.mxu0 %v863
      %923 = vmatprep.subr.mxu0 %v866
      %924 = vmatpush1.msra.mxu0 %v865
      %925 = vmatprep.subr.mxu0 %v884
      %926 = vmatpush1.msra.mxu0 %v883
      %927 = vmatprep.subr.mxu0 %v886
      %928 = vmatpush1.msra.mxu0 %v885
      %929 = vmatprep.subr.mxu0 0.0
      %930 = vmatpush1.msra.mxu0 0.0
      %931 = vmatprep.subr.mxu0 0.0
      %932 = vmatpush1.msra.mxu0 0.0
      %933 = vmatprep.subr.mxu0 0.0
      %934 = vmatpush1.msra.mxu0 0.0
      %935 = vmatprep.subr.mxu0 0.0
      %936 = vmatpush1.msra.mxu0 0.0
      %937 = vmatprep.subr.mxu0 0.0
      %938 = vmatpush1.msra.mxu0 0.0
      %939 = vmatprep.subr.mxu0 0.0
      %940 = vmatpush1.msra.mxu0 0.0
      %941 = vmatprep.subr.mxu0 0.0
      %942 = vmatpush1.msra.mxu0 0.0
      %943 = vmatprep.subr.mxu0 0.0
      %944 = vmatpush1.msra.mxu0 0.0
      %945 = vmatprep.subr.mxu0 0.0
      %946 = vmatpush1.msra.mxu0 0.0
      %947 = vmatprep.subr.mxu0 0.0
      %948 = vmatpush1.msra.mxu0 0.0
      %949 = vmatprep.subr.mxu0 0.0
      %950 = vmatpush1.msra.mxu0 0.0
      %951 = vmatprep.subr.mxu0 0.0
      %952 = vmatpush1.msra.mxu0 0.0
      %953 = vmatprep.subr.mxu0 0.0
      %954 = vmatpush1.msra.mxu0 0.0
      %955 = vmatprep.subr.mxu0 0.0
      %956 = vmatpush1.msra.mxu0 0.0
      %957 = vmatprep.mubr.f32.mxu0 %v891
      %958 = vmatmul.mubr.f32.gmra.mrb[0].mxu0 %v887
      %v959 = vpop.f32.mrb[0].mxu0
      %v960 = vadd.f32 0.0, %v959
      %v961 = vpop.f32.mrb[0].mxu0
      %v962 = vadd.f32 0.0, %v961
      %963 = vdwg.mxu0
      %v964 = vmul.f32 %v960, 0.5
      %v965 = vmul.f32 %v962, 0.5
      %v966 = vmul.f32 %v960, %v960
      %v967 = vmul.f32 %v962, %v962
      %v968 = vmul.f32 %v966, %v960
      %v969 = vmul.f32 %v967, %v962
      %v970 = vmul.f32 %v968, 0.044715
      %v971 = vmul.f32 %v969, 0.044715
      %v972 = vadd.f32 %v960, %v970
      %v973 = vadd.f32 %v962, %v971
      %v974 = vmul.f32 %v972, 0.7978846
      %v975 = vmul.f32 %v973, 0.7978846
      %v976 = vtanh.pop %v974
      %v977 = vtanh.pop %v975
      %v978 = vadd.f32 %v976, 1.0
      %v979 = vadd.f32 %v977, 1.0
      %v980 = vmul.f32 %v964, %v978
      %v981 = vmul.f32 %v965, %v979
      %982 = vrot.lane.b32.xlu0 %v980, 17
      %v983 = vpop.permute.xlu0 %982
      %984 = vrot.lane.b32.xlu0 %v981, 17
      %v985 = vpop.permute.xlu0 %984
      %v986 = vsel %vm278, %v983, %v985
      %v987 = vsel %vm278, %v985, %v983
      %v988 = vmul.f32 %v987, %v281
      %v989 = vmul.f32 %v986, %v282
      %990 = vrot.lane.b32.xlu0 %v980, 16
      %v991 = vpop.permute.xlu0 %990
      %992 = vrot.lane.b32.xlu0 %v981, 16
      %v993 = vpop.permute.xlu0 %992
      %v994 = vsel %vm289, %v991, %v993
      %v995 = vsel %vm289, %v993, %v991
      %v996 = vmul.f32 %v995, %v293
      %v997 = vmul.f32 %v994, %v294
      %998 = vrot.lane.b32.xlu0 %v980, 15
      %v999 = vpop.permute.xlu0 %998
      %1000 = vrot.lane.b32.xlu0 %v981, 15
      %v1001 = vpop.permute.xlu0 %1000
      %v1002 = vsel %vm301, %v999, %v1001
      %v1003 = vsel %vm301, %v1001, %v999
      %v1004 = vmul.f32 %v1003, %v305
      %v1005 = vmul.f32 %v1002, %v306
      %1006 = vrot.lane.b32.xlu0 %v980, 1
      %v1007 = vpop.permute.xlu0 %1006
      %1008 = vrot.lane.b32.xlu0 %v981, 1
      %v1009 = vpop.permute.xlu0 %1008
      %v1010 = vsel %vm313, %v1007, %v1009
      %v1011 = vsel %vm313, %v1009, %v1007
      %v1012 = vmul.f32 %v1011, %v317
      %v1013 = vmul.f32 %v1010, %v318
      %1014 = vrot.lane.b32.xlu0 %v980, 127
      %v1015 = vpop.permute.xlu0 %1014
      %1016 = vrot.lane.b32.xlu0 %v981, 127
      %v1017 = vpop.permute.xlu0 %1016
      %v1018 = vsel %vm325, %v1015, %v1017
      %v1019 = vsel %vm325, %v1017, %v1015
      %v1020 = vmul.f32 %v1018, %v329
      %v1021 = vmul.f32 %v1019, %v330
      %1022 = vrot.lane.b32.xlu0 %v980, 113
      %v1023 = vpop.permute.xlu0 %1022
      %1024 = vrot.lane.b32.xlu0 %v981, 113
      %v1025 = vpop.permute.xlu0 %1024
      %v1026 = vsel %vm337, %v1023, %v1025
      %v1027 = vsel %vm337, %v1025, %v1023
      %v1028 = vmul.f32 %v1026, %v341
      %v1029 = vmul.f32 %v1027, %v342
      %1030 = vrot.lane.b32.xlu0 %v980, 112
      %v1031 = vpop.permute.xlu0 %1030
      %1032 = vrot.lane.b32.xlu0 %v981, 112
      %v1033 = vpop.permute.xlu0 %1032
      %v1034 = vsel %vm349, %v1031, %v1033
      %v1035 = vsel %vm349, %v1033, %v1031
      %v1036 = vmul.f32 %v1034, %v353
      %v1037 = vmul.f32 %v1035, %v354
      %1038 = vrot.lane.b32.xlu0 %v980, 111
      %v1039 = vpop.permute.xlu0 %1038
      %1040 = vrot.lane.b32.xlu0 %v981, 111
      %v1041 = vpop.permute.xlu0 %1040
      %v1042 = vsel %vm361, %v1039, %v1041
      %v1043 = vsel %vm361, %v1041, %v1039
      %v1044 = vmul.f32 %v1042, %v365
      %v1045 = vmul.f32 %v1043, %v366
      %v1046 = vld [vmem:[%s4 + $0x30] sm:$0xff]
      %v1047 = vld [vmem:[%s5 + $0x10] sm:$0xff]
      %1049 = vset.pattern.permute.xlu0 0
      %1050 = vperm.xlu0 %1049, %v1047
      %v1051 = vpop.permute.xlu0 %1050
      %v1054 = vsel %vm376, %v1046, 0
      %1056 = vmatprep.subr.mxu0 %v989
      %1057 = vmatpush1.msra.mxu0 %v988
      %1058 = vmatprep.subr.mxu0 %v997
      %1059 = vmatpush1.msra.mxu0 %v996
      %1060 = vmatprep.subr.mxu0 %v1005
      %1061 = vmatpush1.msra.mxu0 %v1004
      %1062 = vmatprep.subr.mxu0 %v1013
      %1063 = vmatpush1.msra.mxu0 %v1012
      %1064 = vmatprep.subr.mxu0 %v981
      %1065 = vmatpush1.msra.mxu0 %v980
      %1066 = vmatprep.subr.mxu0 %v1021
      %1067 = vmatpush1.msra.mxu0 %v1020
      %1068 = vmatprep.subr.mxu0 %v1029
      %1069 = vmatpush1.msra.mxu0 %v1028
      %1070 = vmatprep.subr.mxu0 %v1037
      %1071 = vmatpush1.msra.mxu0 %v1036
      %1072 = vmatprep.subr.mxu0 %v1045
      %1073 = vmatpush1.msra.mxu0 %v1044
      %1074 = vmatprep.subr.mxu0 0.0
      %1075 = vmatpush1.msra.mxu0 0.0
      %1076 = vmatprep.subr.mxu0 0.0
      %1077 = vmatpush1.msra.mxu0 0.0
      %1078 = vmatprep.subr.mxu0 0.0
      %1079 = vmatpush1.msra.mxu0 0.0
      %1080 = vmatprep.subr.mxu0 0.0
      %1081 = vmatpush1.msra.mxu0 0.0
      %1082 = vmatprep.subr.mxu0 0.0
      %1083 = vmatpush1.msra.mxu0 0.0
      %1084 = vmatprep.subr.mxu0 0.0
      %1085 = vmatpush1.msra.mxu0 0.0
      %1086 = vmatprep.subr.mxu0 0.0
      %1087 = vmatpush1.msra.mxu0 0.0
      %1088 = vmatprep.subr.mxu0 0.0
      %1089 = vmatpush1.msra.mxu0 0.0
      %1090 = vmatprep.subr.mxu0 0.0
      %1091 = vmatpush1.msra.mxu0 0.0
      %1092 = vmatprep.subr.mxu0 0.0
      %1093 = vmatpush1.msra.mxu0 0.0
      %1094 = vmatprep.subr.mxu0 0.0
      %1095 = vmatpush1.msra.mxu0 0.0
      %1096 = vmatprep.subr.mxu0 0.0
      %1097 = vmatpush1.msra.mxu0 0.0
      %1098 = vmatprep.subr.mxu0 0.0
      %1099 = vmatpush1.msra.mxu0 0.0
      %1100 = vmatprep.subr.mxu0 0.0
      %1101 = vmatpush1.msra.mxu0 0.0
      %1102 = vmatprep.subr.mxu0 0.0
      %1103 = vmatpush1.msra.mxu0 0.0
      %1104 = vmatprep.subr.mxu0 0.0
      %1105 = vmatpush1.msra.mxu0 0.0
      %1106 = vmatprep.subr.mxu0 0.0
      %1107 = vmatpush1.msra.mxu0 0.0
      %1108 = vmatprep.subr.mxu0 0.0
      %1109 = vmatpush1.msra.mxu0 0.0
      %1110 = vmatprep.subr.mxu0 0.0
      %1111 = vmatpush1.msra.mxu0 0.0
      %1112 = vmatprep.subr.mxu0 0.0
      %1113 = vmatpush1.msra.mxu0 0.0
      %1114 = vmatprep.subr.mxu0 0.0
      %1115 = vmatpush1.msra.mxu0 0.0
      %1116 = vmatprep.subr.mxu0 0.0
      %1117 = vmatpush1.msra.mxu0 0.0
      %1118 = vmatprep.subr.mxu0 0.0
      %1119 = vmatpush1.msra.mxu0 0.0
      %1120 = vmatprep.mubr.f32.mxu0 0.0
      %1121 = vmatmul.mubr.f32.gmra.mrb[0].mxu0 %v1054
      %v1122 = vpop.f32.mrb[0].mxu0
      %v1123 = vadd.f32 %v1051, %v1122
      %v1124 = vpop.f32.mrb[0].mxu0
      %v1125 = vadd.f32 %v1051, %v1124
      %1126 = vdwg.mxu0
      %v1127 = vadd.f32 %v1123, %v980
      %v1128 = vadd.f32 %v1125, %v981
      %v1129 = vmul.f32 %v1127, 0.5
      %v1130 = vmul.f32 %v1128, 0.5
      %v1131 = vmul.f32 %v1127, %v1127
      %v1132 = vmul.f32 %v1128, %v1128
      %v1133 = vmul.f32 %v1131, %v1127
      %v1134 = vmul.f32 %v1132, %v1128
      %v1135 = vmul.f32 %v1133, 0.044715
      %v1136 = vmul.f32 %v1134, 0.044715
      %v1137 = vadd.f32 %v1127, %v1135
      %v1138 = vadd.f32 %v1128, %v1136
      %v1139 = vmul.f32 %v1137, 0.7978846
      %v1140 = vmul.f32 %v1138, 0.7978846
      %v1141 = vtanh.pop %v1139
      %v1142 = vtanh.pop %v1140
      %v1143 = vadd.f32 %v1141, 1.0
      %v1144 = vadd.f32 %v1142, 1.0
      %v1145 = vmul.f32 %v1129, %v1143
      %v1146 = vmul.f32 %v1130, %v1144
      %1147 = vrot.lane.b32.xlu0 %v1145, 17
      %v1148 = vpop.permute.xlu0 %1147
      %1149 = vrot.lane.b32.xlu0 %v1146, 17
      %v1150 = vpop.permute.xlu0 %1149
      %v1151 = vsel %vm278, %v1148, %v1150
      %v1152 = vsel %vm278, %v1150, %v1148
      %v1153 = vmul.f32 %v1152, %v281
      %v1154 = vmul.f32 %v1151, %v282
      %1155 = vrot.lane.b32.xlu0 %v1145, 16
      %v1156 = vpop.permute.xlu0 %1155
      %1157 = vrot.lane.b32.xlu0 %v1146, 16
      %v1158 = vpop.permute.xlu0 %1157
      %v1159 = vsel %vm289, %v1156, %v1158
      %v1160 = vsel %vm289, %v1158, %v1156
      %v1161 = vmul.f32 %v1160, %v293
      %v1162 = vmul.f32 %v1159, %v294
      %1163 = vrot.lane.b32.xlu0 %v1145, 15
      %v1164 = vpop.permute.xlu0 %1163
      %1165 = vrot.lane.b32.xlu0 %v1146, 15
      %v1166 = vpop.permute.xlu0 %1165
      %v1167 = vsel %vm301, %v1164, %v1166
      %v1168 = vsel %vm301, %v1166, %v1164
      %v1169 = vmul.f32 %v1168, %v305
      %v1170 = vmul.f32 %v1167, %v306
      %1171 = vrot.lane.b32.xlu0 %v1145, 1
      %v1172 = vpop.permute.xlu0 %1171
      %1173 = vrot.lane.b32.xlu0 %v1146, 1
      %v1174 = vpop.permute.xlu0 %1173
      %v1175 = vsel %vm313, %v1172, %v1174
      %v1176 = vsel %vm313, %v1174, %v1172
      %v1177 = vmul.f32 %v1176, %v317
      %v1178 = vmul.f32 %v1175, %v318
      %1179 = vrot.lane.b32.xlu0 %v1145, 127
      %v1180 = vpop.permute.xlu0 %1179
      %1181 = vrot.lane.b32.xlu0 %v1146, 127
      %v1182 = vpop.permute.xlu0 %1181
      %v1183 = vsel %vm325, %v1180, %v1182
      %v1184 = vsel %vm325, %v1182, %v1180
      %v1185 = vmul.f32 %v1183, %v329
      %v1186 = vmul.f32 %v1184, %v330
      %1187 = vrot.lane.b32.xlu0 %v1145, 113
      %v1188 = vpop.permute.xlu0 %1187
      %1189 = vrot.lane.b32.xlu0 %v1146, 113
      %v1190 = vpop.permute.xlu0 %1189
      %v1191 = vsel %vm337, %v1188, %v1190
      %v1192 = vsel %vm337, %v1190, %v1188
      %v1193 = vmul.f32 %v1191, %v341
      %v1194 = vmul.f32 %v1192, %v342
      %1195 = vrot.lane.b32.xlu0 %v1145, 112
      %v1196 = vpop.permute.xlu0 %1195
      %1197 = vrot.lane.b32.xlu0 %v1146, 112
      %v1198 = vpop.permute.xlu0 %1197
      %v1199 = vsel %vm349, %v1196, %v1198
      %v1200 = vsel %vm349, %v1198, %v1196
      %v1201 = vmul.f32 %v1199, %v353
      %v1202 = vmul.f32 %v1200, %v354
      %1203 = vrot.lane.b32.xlu0 %v1145, 111
      %v1204 = vpop.permute.xlu0 %1203
      %1205 = vrot.lane.b32.xlu0 %v1146, 111
      %v1206 = vpop.permute.xlu0 %1205
      %v1207 = vsel %vm361, %v1204, %v1206
      %v1208 = vsel %vm361, %v1206, %v1204
      %v1209 = vmul.f32 %v1207, %v365
      %v1210 = vmul.f32 %v1208, %v366
      %v1211 = vld [vmem:[%s4 + $0x40] sm:$0xff]
      %v1212 = vld [vmem:[%s5 + $0x18] sm:$0xff]
      %1214 = vset.pattern.permute.xlu0 0
      %1215 = vperm.xlu0 %1214, %v1212
      %v1216 = vpop.permute.xlu0 %1215
      %v1219 = vsel %vm376, %v1211, 0
      %1221 = vmatprep.subr.mxu0 %v1154
      %1222 = vmatpush1.msra.mxu0 %v1153
      %1223 = vmatprep.subr.mxu0 %v1162
      %1224 = vmatpush1.msra.mxu0 %v1161
      %1225 = vmatprep.subr.mxu0 %v1170
      %1226 = vmatpush1.msra.mxu0 %v1169
      %1227 = vmatprep.subr.mxu0 %v1178
      %1228 = vmatpush1.msra.mxu0 %v1177
      %1229 = vmatprep.subr.mxu0 %v1146
      %1230 = vmatpush1.msra.mxu0 %v1145
      %1231 = vmatprep.subr.mxu0 %v1186
      %1232 = vmatpush1.msra.mxu0 %v1185
      %1233 = vmatprep.subr.mxu0 %v1194
      %1234 = vmatpush1.msra.mxu0 %v1193
      %1235 = vmatprep.subr.mxu0 %v1202
      %1236 = vmatpush1.msra.mxu0 %v1201
      %1237 = vmatprep.subr.mxu0 %v1210
      %1238 = vmatpush1.msra.mxu0 %v1209
      %1239 = vmatprep.subr.mxu0 0.0
      %1240 = vmatpush1.msra.mxu0 0.0
      %1241 = vmatprep.subr.mxu0 0.0
      %1242 = vmatpush1.msra.mxu0 0.0
      %1243 = vmatprep.subr.mxu0 0.0
      %1244 = vmatpush1.msra.mxu0 0.0
      %1245 = vmatprep.subr.mxu0 0.0
      %1246 = vmatpush1.msra.mxu0 0.0
      %1247 = vmatprep.subr.mxu0 0.0
      %1248 = vmatpush1.msra.mxu0 0.0
      %1249 = vmatprep.subr.mxu0 0.0
      %1250 = vmatpush1.msra.mxu0 0.0
      %1251 = vmatprep.subr.mxu0 0.0
      %1252 = vmatpush1.msra.mxu0 0.0
      %1253 = vmatprep.subr.mxu0 0.0
      %1254 = vmatpush1.msra.mxu0 0.0
      %1255 = vmatprep.subr.mxu0 0.0
      %1256 = vmatpush1.msra.mxu0 0.0
      %1257 = vmatprep.subr.mxu0 0.0
      %1258 = vmatpush1.msra.mxu0 0.0
      %1259 = vmatprep.subr.mxu0 0.0
      %1260 = vmatpush1.msra.mxu0 0.0
      %1261 = vmatprep.subr.mxu0 0.0
      %1262 = vmatpush1.msra.mxu0 0.0
      %1263 = vmatprep.subr.mxu0 0.0
      %1264 = vmatpush1.msra.mxu0 0.0
      %1265 = vmatprep.subr.mxu0 0.0
      %1266 = vmatpush1.msra.mxu0 0.0
      %1267 = vmatprep.subr.mxu0 0.0
      %1268 = vmatpush1.msra.mxu0 0.0
      %1269 = vmatprep.subr.mxu0 0.0
      %1270 = vmatpush1.msra.mxu0 0.0
      %1271 = vmatprep.subr.mxu0 0.0
      %1272 = vmatpush1.msra.mxu0 0.0
      %1273 = vmatprep.subr.mxu0 0.0
      %1274 = vmatpush1.msra.mxu0 0.0
      %1275 = vmatprep.subr.mxu0 0.0
      %1276 = vmatpush1.msra.mxu0 0.0
      %1277 = vmatprep.subr.mxu0 0.0
      %1278 = vmatpush1.msra.mxu0 0.0
      %1279 = vmatprep.subr.mxu0 0.0
      %1280 = vmatpush1.msra.mxu0 0.0
      %1281 = vmatprep.subr.mxu0 0.0
      %1282 = vmatpush1.msra.mxu0 0.0
      %1283 = vmatprep.subr.mxu0 0.0
      %1284 = vmatpush1.msra.mxu0 0.0
      %1285 = vmatprep.mubr.f32.mxu0 0.0
      %1286 = vmatmul.mubr.f32.gmra.mrb[0].mxu0 %v1219
      %v1287 = vpop.f32.mrb[0].mxu0
      %v1288 = vadd.f32 %v1216, %v1287
      %v1289 = vpop.f32.mrb[0].mxu0
      %v1290 = vadd.f32 %v1216, %v1289
      %1291 = vdwg.mxu0
      %v1292 = vadd.f32 %v1288, %v1145
      %v1293 = vadd.f32 %v1290, %v1146
      %v1294 = vmul.f32 %v1292, 0.5
      %v1295 = vmul.f32 %v1293, 0.5
      %v1296 = vmul.f32 %v1292, %v1292
      %v1297 = vmul.f32 %v1293, %v1293
      %v1298 = vmul.f32 %v1296, %v1292
      %v1299 = vmul.f32 %v1297, %v1293
      %v1300 = vmul.f32 %v1298, 0.044715
      %v1301 = vmul.f32 %v1299, 0.044715
      %v1302 = vadd.f32 %v1292, %v1300
      %v1303 = vadd.f32 %v1293, %v1301
      %v1304 = vmul.f32 %v1302, 0.7978846
      %v1305 = vmul.f32 %v1303, 0.7978846
      %v1306 = vtanh.pop %v1304
      %v1307 = vtanh.pop %v1305
      %v1308 = vadd.f32 %v1306, 1.0
      %v1309 = vadd.f32 %v1307, 1.0
      %v1310 = vmul.f32 %v1294, %v1308
      %v1311 = vmul.f32 %v1295, %v1309
      %1312 = vst [vmem:[%s268] sm:$0xff] %v1310
      %1313 = vst [vmem:[%s268 + $0x8] sm:$0xff] %v1311
      %p1314 = scmp.lt.s32.totalorder %s17, 1
      %s1315 = scalar_select %p1314, %s17, 1
      %s1316 = smul.addr %s1315, 2
      %s1317 = smul.addr %s1316, 8
      %s1318 = scalar_lea.vmem %s6, %s1317
      // Predicated region
      $region45: #{upsample_forward.1} parent=43 // pred_check
        %p1319 = pneg %p171
      $region46: #{upsample_forward.1} parent=43 // pred_check_branch
        %1321 = sbr.rel (%p1319) target = $region48
      $region47: #{upsample_forward.1} parent=43 // pred_region
        _
      $region48: #{upsample_forward.1} parent=43 // pred_fallthru
        _
    $region44: #{upsample_forward.1} parent=5 // pred_fallthru
      _
    %p1322 = scmp.le.s32.totalorder 2, %s12
    // Predicated region
    $region49: #{upsample_forward.1} parent=5 // pred_check
      %p1323 = pneg %p1322
    $region50: #{upsample_forward.1} parent=5 // pred_check_branch
      %1325 = sbr.rel (%p1323) target = $region52
    $region51: #{upsample_forward.1} parent=5 // pred_region
      %s1326 = ssub.s32 %s12, 2
      // Predicated region
      $region53: #{upsample_forward.1} parent=51 // pred_check
        %p1327 = pneg %p177
      $region54: #{upsample_forward.1} parent=51 // pred_check_branch
        %1329 = sbr.rel (%p1327) target = $region56
      $region55: #{upsample_forward.1} parent=51 // pred_region
        %p1330 = scmp.lt.s32.totalorder %s18, 1
        %s1331 = scalar_select %p1330, %s18, 1
        %s1332 = smul.addr %s1331, 2
        %s1333 = smul.addr %s1332, 8
        %s1334 = scalar_lea.vmem %s6, %s1333
      $region56: #{upsample_forward.1} parent=51 // pred_fallthru
        _
    $region52: #{upsample_forward.1} parent=5 // pred_fallthru
      _
  $region6: #{upsample_forward.1} parent=0 // loop_footer
    %s16 = sadd.s32 1, %s12
  $region7: #{upsample_forward.1} parent=0 // loop_footer_branch
    %11 = sbr.rel target = $region3
  $region8: #{upsample_forward.1} parent=0 // loop_exit
    _

</llo_original>
